<compile_context>
chip_gen: v5e
topology: v5e:2x2
jax: 0.10.0
libtpu: 0.0.40
codegen_flags: <defaults>
</compile_context>

<pallas_src>
import functools

import jax
import jax.numpy as jnp
from jax.experimental import pallas as pl
from jax.experimental.pallas import tpu as pltpu


def _pre_extraction_kernel(x_ref, wt_ref, wa_ref, ba_ref, wb_ref, bb_ref, o_ref,
                           *, fold, ew_dtype):
    # x_ref : (G*S/F, F*Dp)   matmul dtype, lane-folded (F points per row)
    # wt_ref: (F*Dp, F*C)     block-diagonal transfer weight (bias folded in)
    # wa_ref, wb_ref: (F*C, F*C) block-diagonal block weights
    # ba_ref, bb_ref: (1, F*C)   tiled biases, elementwise dtype
    # o_ref : (C, G) f32       lane-dense pooled output (transposed)
    C, G = o_ref.shape
    F = fold
    rows = x_ref.shape[0]
    s_over_f = rows // G

    x = x_ref[...]
    mm_dtype = x.dtype

    # transfer: ConvBNReLU1D (1x1 conv + folded BN; bias rides inside the matmul)
    h = jnp.dot(x, wt_ref[...], preferred_element_type=jnp.float32)
    h = jnp.maximum(h.astype(ew_dtype), 0)                              # [rows, F*C]

    # ConvBNReLURes1D (groups=1, res_expansion=1): act(net2(net1(h)) + h)
    t = jnp.dot(h.astype(mm_dtype), wa_ref[...], preferred_element_type=jnp.float32)
    t = jnp.maximum(t.astype(ew_dtype) + ba_ref[...], 0)                # [rows, F*C]
    u = jnp.dot(t.astype(mm_dtype), wb_ref[...], preferred_element_type=jnp.float32)
    y = jnp.maximum(u.astype(ew_dtype) + bb_ref[...] + h, 0)            # [rows, F*C]

    # adaptive_max_pool1d(., 1) over the S points of every group, done in the
    # folded layout: sublane max over S/F, then an XLU roll+max tree over the
    # F lane-fold copies; finally a small transpose for the (C, G) store.
    yp = y.reshape(G, s_over_f, F * C)
    r = jnp.max(yp, axis=1).astype(jnp.float32)                         # [G, F*C]
    shift = (F // 2) * C
    while shift >= C:
        r = jnp.maximum(r, pltpu.roll(r, shift, axis=1))
        shift //= 2
    pooled = r[:, :C]                                                   # [G, C]
    o_ref[...] = pooled.T.astype(o_ref.dtype)                           # [C, G]


def _fold_conv_bn(w, b, gamma, beta, mean, var, eps=1e-5):
    """Fold Conv1d(k=1) weight [Co, Ci] + bias [Co] with BatchNorm1d params.

    Returns (w_t, b_f) with w_t: [Ci, Co] (ready for x @ w_t), b_f: [1, Co].
    """
    scale = gamma / jnp.sqrt(var + eps)                  # [Co]
    w_fold = w * scale[:, None]                          # [Co, Ci]
    b_fold = (b - mean) * scale + beta                   # [Co]
    return w_fold.T, b_fold[None, :]


def _tpu_kind():
    try:
        return jax.devices()[0].device_kind.lower()
    except Exception:
        return ""


def _choose_fold(s, C, mxu_cols):
    """Largest power-of-two F with F | s and F*C <= mxu_cols (capped at 8)."""
    cap = max(1, mxu_cols // max(C, 1))
    f = 1
    while f * 2 <= min(cap, 8) and s % (f * 2) == 0:
        f *= 2
    return f


def _choose_tiling(BN, group_tile):
    """Return (G, n_tiles): groups per grid step and grid size."""
    if BN <= 256:
        return BN, 1                      # single tile; blocks == full arrays
    max_g = max(128, min(group_tile, (BN // 256) * 128))   # >= 2 tiles
    n_tiles = -(-BN // max_g)
    per = -(-BN // n_tiles)
    G = -(-per // 128) * 128              # lane-dense (C, G) output blocks
    # Prefer an even tile count (v7x: 2 TensorCores) if padding waste stays small.
    if n_tiles % 2 == 1:
        n2 = n_tiles + 1
        per2 = -(-BN // n2)
        G2 = -(-per2 // 128) * 128
        if n2 * G2 - BN <= max(BN // 8, 128):
            n_tiles, G = n2, G2
    return G, n_tiles


def pre_extraction_forward(x, params, group_tile=2048, matmul_dtype=jnp.bfloat16,
                           elementwise_dtype=None):
    """x: [b, n, s, d] float32 -> [b, out_channels, n] float32."""
    b, n, s, d = x.shape
    BN = b * n

    kind = _tpu_kind()
    is_v5e = ("v5" in kind) and ("lite" in kind or "v5e" in kind)
    mxu_cols = 128 if is_v5e else 256

    if elementwise_dtype is None:
        if jnp.dtype(matmul_dtype) == jnp.dtype(jnp.float32) or is_v5e:
            elementwise_dtype = jnp.float32       # v5e has no bf16 VALU
        else:
            elementwise_dtype = jnp.bfloat16
    ew_dtype = elementwise_dtype

    wt, bt = _fold_conv_bn(*params["transfer"])          # [d, C], [1, C]
    wa, ba = _fold_conv_bn(*params["block_net1"])        # [C, C], [1, C]
    wb, bb = _fold_conv_bn(*params["block_net2"])        # [C, C], [1, C]
    C = wt.shape[1]

    # Pad Din so there is a spare column for the folded transfer bias and the
    # sublane layout is clean (multiple of 8): d=11 -> Dp=16.
    Dp = -(-(d + 1) // 8) * 8

    # Lane-fold factor: pack F consecutive points into lanes.
    F = _choose_fold(s, C, mxu_cols)

    G, n_tiles = _choose_tiling(BN, group_tile)
    BN_pad = G * n_tiles

    # ---- Host-side operand prep --------------------------------------------
    # PyTorch: x.permute(0,1,3,2).reshape(-1, d, s) == [b*n, d, s] (NCW); the
    # channels-last equivalent is x.reshape(b*n, s, d).  Pad d -> Dp, set a
    # ones column for the folded transfer bias, pad BN, fold F points -> lanes.
    xk = x.reshape(BN, s, d)
    xk = jnp.pad(xk, ((0, 0), (0, 0), (0, Dp - d)))
    xk = xk.at[:, :, d].set(1.0)                          # bias-rider column
    xk = jnp.pad(xk, ((0, BN_pad - BN), (0, 0), (0, 0)))
    xk = xk.reshape(BN_pad * s // F, F * Dp).astype(matmul_dtype)

    # Transfer weight padded to Dp rows with the bias folded into row d, then
    # all weights replicated block-diagonally for the folded slab.
    wt_p = jnp.zeros((Dp, C), jnp.float32).at[:d, :].set(wt).at[d, :].set(bt[0])
    eye = jnp.eye(F, dtype=jnp.float32)
    wt_bd = jnp.kron(eye, wt_p).astype(matmul_dtype)      # [F*Dp, F*C]
    wa_bd = jnp.kron(eye, wa).astype(matmul_dtype)        # [F*C, F*C]
    wb_bd = jnp.kron(eye, wb).astype(matmul_dtype)        # [F*C, F*C]
    ba_t = jnp.tile(ba, (1, F)).astype(ew_dtype)          # [1, F*C]
    bb_t = jnp.tile(bb, (1, F)).astype(ew_dtype)          # [1, F*C]

    # ---- VMEM / cost bookkeeping --------------------------------------------
    mm_bytes = jnp.dtype(matmul_dtype).itemsize
    ew_bytes = jnp.dtype(ew_dtype).itemsize
    rows = G * s // F
    per_step = (2 * rows * F * Dp * mm_bytes                              # x slab (double-buffered)
                + (F * Dp * F * C + 2 * F * C * F * C) * mm_bytes         # resident weights
                + 2 * F * C * ew_bytes                                    # biases
                + 4 * rows * F * C * 4                                    # h/t/u/pool temporaries
                + 2 * C * G * 4)                                          # out block (double-buffered)
    # v7x has only 64 MiB physical VMEM per TensorCore -> keep headroom (<=48 MiB).
    vmem_limit = max(32 << 20, min(48 << 20, int(per_step * 1.5) + (4 << 20)))

    flops = 2 * rows * n_tiles * (F * Dp * F * C + 2 * (F * C) ** 2)
    bytes_accessed = (xk.size * mm_bytes
                      + (wt_bd.size + wa_bd.size + wb_bd.size) * mm_bytes
                      + (ba_t.size + bb_t.size) * ew_bytes
                      + C * BN_pad * 4)

    kernel = functools.partial(_pre_extraction_kernel, fold=F, ew_dtype=ew_dtype)

    out = pl.pallas_call(
        kernel,
        out_shape=jax.ShapeDtypeStruct((C, BN_pad), jnp.float32),
        grid=(n_tiles,),
        in_specs=[
            pl.BlockSpec((rows, F * Dp), lambda i: (i, 0)),    # folded x slab, G groups/step
            pl.BlockSpec((F * Dp, F * C), lambda i: (0, 0)),   # transfer weight (resident)
            pl.BlockSpec((F * C, F * C), lambda i: (0, 0)),    # block net1 weight
            pl.BlockSpec((1, F * C), lambda i: (0, 0)),        # block net1 bias
            pl.BlockSpec((F * C, F * C), lambda i: (0, 0)),    # block net2 weight
            pl.BlockSpec((1, F * C), lambda i: (0, 0)),        # block net2 bias
        ],
        out_specs=pl.BlockSpec((C, G), lambda i: (0, i)),      # lane-dense pooled block
        compiler_params=pltpu.CompilerParams(
            dimension_semantics=("parallel",),
            vmem_limit_bytes=vmem_limit,
        ),
        cost_estimate=pl.CostEstimate(
            flops=flops, transcendentals=0, bytes_accessed=bytes_accessed),
    )(xk, wt_bd, wa_bd, ba_t, wb_bd, bb_t)

    # [C, BN_pad] -> drop padding -> [b, C, n]  (matches .permute(0, 2, 1))
    out = out[:, :BN].reshape(C, b, n)
    return jnp.transpose(out, (1, 0, 2))


def _reference_forward(x, params):
    """Pure-JAX f32 reference with identical folded-BN math, for verification."""
    b, n, s, d = x.shape
    xk = x.reshape(b * n, s, d).astype(jnp.float32)
    wt, bt = _fold_conv_bn(*params["transfer"])
    wa, ba = _fold_conv_bn(*params["block_net1"])
    wb, bb = _fold_conv_bn(*params["block_net2"])
    h = jnp.maximum(jnp.einsum("gsd,dc->gsc", xk, wt) + bt, 0.0)
    t = jnp.maximum(jnp.einsum("gsc,ce->gse", h, wa) + ba, 0.0)
    u = jnp.einsum("gse,ec->gsc", t, wb) + bb
    h = jnp.maximum(u + h, 0.0)
    o = jnp.max(h, axis=1)                       # [b*n, C]
    return jnp.transpose(o.reshape(b, n, -1), (0, 2, 1))


def make_params(key, in_channels, out_channels):
    """Deterministic parameters matching the PyTorch module's shapes."""
    ks = jax.random.split(key, 12)
    C = out_channels

    def conv_bn(kw, kb, kg, kbeta, cin, cout):
        w = 0.1 * jax.random.normal(kw, (cout, cin), jnp.float32)
        b = 0.1 * jax.random.normal(kb, (cout,), jnp.float32)
        gamma = 1.0 + 0.05 * jax.random.normal(kg, (cout,), jnp.float32)
        beta = 0.05 * jax.random.normal(kbeta, (cout,), jnp.float32)
        mean = jnp.zeros((cout,), jnp.float32)
        var = jnp.ones((cout,), jnp.float32)
        return (w, b, gamma, beta, mean, var)

    return {
        # transfer: Conv1d(in_channels -> C, k=1) + BN(C)
        "transfer": conv_bn(ks[0], ks[1], ks[2], ks[3], in_channels, C),
        # block net1: Conv1d(C -> C*res_expansion=C, k=1) + BN(C)
        "block_net1": conv_bn(ks[4], ks[5], ks[6], ks[7], C, C),
        # block net2 (groups=1): Conv1d(C -> C, k=1) + BN(C)
        "block_net2": conv_bn(ks[8], ks[9], ks[10], ks[11], C, C),
    }


if __name__ == "__main__":
    # Module config (defaults of PreExtraction with small sizes)
    channels = 4
    out_channels = 32
    use_xyz = True
    in_channels = 3 + 2 * channels if use_xyz else 2 * channels   # = 11

    b, n, s = 2, 8, 16   # x: [b, groups, samples_per_group, in_channels]
    key = jax.random.PRNGKey(0)
    kx, kp = jax.random.split(key)
    x = jax.random.normal(kx, (b, n, s, in_channels), jnp.float32)
    params = make_params(kp, in_channels, out_channels)

    y = pre_extraction_forward(x, params)
    y = jax.block_until_ready(y)

    y_ref = _reference_forward(x, params)
    assert y.shape == (b, out_channels, n), y.shape
    # bf16 matmul inputs / bf16 elementwise tail with f32 accumulation vs. a
    # pure-f32 reference: tolerance loosened accordingly.
    err = float(jnp.max(jnp.abs(y - y_ref)))
    assert jnp.allclose(y, y_ref, rtol=5e-2, atol=5e-2), err

    print("KERNEL_OK")
</pallas_src>

<mosaic_0001>
module attributes {stable_mosaic.version = 11 : i64} {
  func.func @_pre_extraction_kernel(%arg0: i32, %arg1: memref<32x128xbf16, #tpu.memory_space<vmem>>, %arg2: memref<128x256xbf16, #tpu.memory_space<vmem>>, %arg3: memref<256x256xbf16, #tpu.memory_space<vmem>>, %arg4: memref<1x256xbf16, #tpu.memory_space<vmem>>, %arg5: memref<256x256xbf16, #tpu.memory_space<vmem>>, %arg6: memref<1x256xbf16, #tpu.memory_space<vmem>>, %arg7: memref<32x16xf32, #tpu.memory_space<vmem>>) attributes {dimension_semantics = [#tpu.dimension_semantics<parallel>], iteration_bounds = array<i64: 1>, scalar_prefetch = 0 : i64, scratch_operands = 0 : i64, tpu.core_type = #tpu.core_type<tc>, window_params = [{transform_indices = @transform_0, window_bounds = array<i64: 32, 128>}, {pipeline_mode = #tpu.pipeline_mode<synchronous>, transform_indices = @transform_1, window_bounds = array<i64: 128, 256>}, {pipeline_mode = #tpu.pipeline_mode<synchronous>, transform_indices = @transform_2, window_bounds = array<i64: 256, 256>}, {pipeline_mode = #tpu.pipeline_mode<synchronous>, transform_indices = @transform_3, window_bounds = array<i64: 1, 256>}, {pipeline_mode = #tpu.pipeline_mode<synchronous>, transform_indices = @transform_4, window_bounds = array<i64: 256, 256>}, {pipeline_mode = #tpu.pipeline_mode<synchronous>, transform_indices = @transform_5, window_bounds = array<i64: 1, 256>}, {transform_indices = @transform_6, window_bounds = array<i64: 32, 16>}]} {
    %c0 = arith.constant 0 : index
    %c0_0 = arith.constant 0 : index
    %0 = vector.load %arg1[%c0, %c0_0] : memref<32x128xbf16, #tpu.memory_space<vmem>>, vector<32x128xbf16>
    %c0_1 = arith.constant 0 : index
    %c0_2 = arith.constant 0 : index
    %1 = vector.load %arg2[%c0_1, %c0_2] : memref<128x256xbf16, #tpu.memory_space<vmem>>, vector<128x256xbf16>
    %cst = arith.constant dense<0.000000e+00> : vector<32x256xf32>
    %2 = tpu.matmul %0, %1, %cst {dimension_numbers = #tpu.dot_dimension_numbers<[1], [0], [0], [1], [0, 0, 1, 1], [], []>} : vector<32x128xbf16>, vector<128x256xbf16>, vector<32x256xf32> -> vector<32x256xf32>
    %3 = arith.truncf %2 : vector<32x256xf32> to vector<32x256xbf16>
    %cst_3 = arith.constant 0.000000e+00 : bf16
    %4 = vector.broadcast %cst_3 : bf16 to vector<32x256xbf16>
    %5 = arith.maximumf %3, %4 : vector<32x256xbf16>
    %c0_4 = arith.constant 0 : index
    %c0_5 = arith.constant 0 : index
    %6 = vector.load %arg3[%c0_4, %c0_5] : memref<256x256xbf16, #tpu.memory_space<vmem>>, vector<256x256xbf16>
    %cst_6 = arith.constant dense<0.000000e+00> : vector<32x256xf32>
    %7 = tpu.matmul %5, %6, %cst_6 {dimension_numbers = #tpu.dot_dimension_numbers<[1], [0], [0], [1], [0, 0, 1, 1], [], []>} : vector<32x256xbf16>, vector<256x256xbf16>, vector<32x256xf32> -> vector<32x256xf32>
    %8 = arith.truncf %7 : vector<32x256xf32> to vector<32x256xbf16>
    %c0_7 = arith.constant 0 : index
    %c0_8 = arith.constant 0 : index
    %9 = vector.load %arg4[%c0_7, %c0_8] : memref<1x256xbf16, #tpu.memory_space<vmem>>, vector<1x256xbf16>
    %10 = vector.broadcast %9 : vector<1x256xbf16> to vector<32x256xbf16>
    %11 = arith.addf %8, %10 : vector<32x256xbf16>
    %cst_9 = arith.constant 0.000000e+00 : bf16
    %12 = vector.broadcast %cst_9 : bf16 to vector<32x256xbf16>
    %13 = arith.maximumf %11, %12 : vector<32x256xbf16>
    %c0_10 = arith.constant 0 : index
    %c0_11 = arith.constant 0 : index
    %14 = vector.load %arg5[%c0_10, %c0_11] : memref<256x256xbf16, #tpu.memory_space<vmem>>, vector<256x256xbf16>
    %cst_12 = arith.constant dense<0.000000e+00> : vector<32x256xf32>
    %15 = tpu.matmul %13, %14, %cst_12 {dimension_numbers = #tpu.dot_dimension_numbers<[1], [0], [0], [1], [0, 0, 1, 1], [], []>} : vector<32x256xbf16>, vector<256x256xbf16>, vector<32x256xf32> -> vector<32x256xf32>
    %16 = arith.truncf %15 : vector<32x256xf32> to vector<32x256xbf16>
    %c0_13 = arith.constant 0 : index
    %c0_14 = arith.constant 0 : index
    %17 = vector.load %arg6[%c0_13, %c0_14] : memref<1x256xbf16, #tpu.memory_space<vmem>>, vector<1x256xbf16>
    %18 = vector.broadcast %17 : vector<1x256xbf16> to vector<32x256xbf16>
    %19 = arith.addf %16, %18 : vector<32x256xbf16>
    %20 = arith.addf %19, %5 : vector<32x256xbf16>
    %cst_15 = arith.constant 0.000000e+00 : bf16
    %21 = vector.broadcast %cst_15 : bf16 to vector<32x256xbf16>
    %22 = arith.maximumf %20, %21 : vector<32x256xbf16>
    %23 = vector.shape_cast %22 : vector<32x256xbf16> to vector<16x2x256xbf16>
    %cst_16 = arith.constant dense<0xFF80> : vector<16x256xbf16>
    %24 = vector.multi_reduction <maximumf>, %23, %cst_16 [1] : vector<16x2x256xbf16> to vector<16x256xbf16>
    %25 = arith.extf %24 : vector<16x256xbf16> to vector<16x256xf32>
    %c128_i32 = arith.constant 128 : i32
    %26 = tpu.dynamic_rotate %25 by %c128_i32 dim 1 : vector<16x256xf32>, i32 -> vector<16x256xf32>
    %27 = arith.maximumf %25, %26 : vector<16x256xf32>
    %c64_i32 = arith.constant 64 : i32
    %28 = tpu.dynamic_rotate %27 by %c64_i32 dim 1 : vector<16x256xf32>, i32 -> vector<16x256xf32>
    %29 = arith.maximumf %27, %28 : vector<16x256xf32>
    %c32_i32 = arith.constant 32 : i32
    %30 = tpu.dynamic_rotate %29 by %c32_i32 dim 1 : vector<16x256xf32>, i32 -> vector<16x256xf32>
    %31 = arith.maximumf %29, %30 : vector<16x256xf32>
    %32 = vector.extract_strided_slice %31 {offsets = [0, 0], sizes = [16, 32], strides = [1, 1]} : vector<16x256xf32> to vector<16x32xf32>
    %33 = tpu.transpose %32, [1, 0] : vector<16x32xf32> -> vector<32x16xf32>
    %c0_17 = arith.constant 0 : index
    %c0_18 = arith.constant 0 : index
    %34 = vector.load %arg7[%c0_17, %c0_18] : memref<32x16xf32, #tpu.memory_space<vmem>>, vector<32x16xf32>
    tpu.vector_store %arg7[%c0_17, %c0_18], %33 {strides = array<i32>} : memref<32x16xf32, #tpu.memory_space<vmem>>, vector<32x16xf32>,
    return
  }
  func.func @transform_0(%arg0: i32) -> (i32, i32) {
    %c0_i32 = arith.constant 0 : i32
    %c0_i32_0 = arith.constant 0 : i32
    return %arg0, %c0_i32 : i32, i32
  }
  func.func @transform_1(%arg0: i32) -> (i32, i32) {
    %c0_i32 = arith.constant 0 : i32
    %c0_i32_0 = arith.constant 0 : i32
    %c0_i32_1 = arith.constant 0 : i32
    return %c0_i32, %c0_i32_0 : i32, i32
  }
  func.func @transform_2(%arg0: i32) -> (i32, i32) {
    %c0_i32 = arith.constant 0 : i32
    %c0_i32_0 = arith.constant 0 : i32
    %c0_i32_1 = arith.constant 0 : i32
    return %c0_i32, %c0_i32_0 : i32, i32
  }
  func.func @transform_3(%arg0: i32) -> (i32, i32) {
    %c0_i32 = arith.constant 0 : i32
    %c0_i32_0 = arith.constant 0 : i32
    %c0_i32_1 = arith.constant 0 : i32
    return %c0_i32, %c0_i32_0 : i32, i32
  }
  func.func @transform_4(%arg0: i32) -> (i32, i32) {
    %c0_i32 = arith.constant 0 : i32
    %c0_i32_0 = arith.constant 0 : i32
    %c0_i32_1 = arith.constant 0 : i32
    return %c0_i32, %c0_i32_0 : i32, i32
  }
  func.func @transform_5(%arg0: i32) -> (i32, i32) {
    %c0_i32 = arith.constant 0 : i32
    %c0_i32_0 = arith.constant 0 : i32
    %c0_i32_1 = arith.constant 0 : i32
    return %c0_i32, %c0_i32_0 : i32, i32
  }
  func.func @transform_6(%arg0: i32) -> (i32, i32) {
    %c0_i32 = arith.constant 0 : i32
    %c0_i32_0 = arith.constant 0 : i32
    return %c0_i32, %arg0 : i32, i32
  }
}

</mosaic_0001>

<llo_original>
// kernel: tpu_custom_call.1
$region0: #{tpu_custom_call.1}
  #allocation0 [shape = 'u32[]', space=smem, size = 0x4, offset = 0x4, fixed_abs, tag = 'smem constant byte address 0x4 - core index']
  #allocation1 [shape = 'u32[72,128]{1,0:T(1,128)}', space=vmem, size = 0x9000, scoped, tag = 'internal scratch']
  %s0 = inlined_call_operand.hbm [shape: bf16[32,128], index: 0, kind: input, shape index: {}]
  %s1 = inlined_call_operand.hbm [shape: bf16[128,256], index: 1, kind: input, shape index: {}]
  %s2 = inlined_call_operand.hbm [shape: bf16[256,256], index: 2, kind: input, shape index: {}]
  %s3 = inlined_call_operand.vmem [shape: bf16[1,256], index: 3, kind: input, shape index: {}]
  %s4 = inlined_call_operand.hbm [shape: bf16[256,256], index: 4, kind: input, shape index: {}]
  %s5 = inlined_call_operand.vmem [shape: bf16[1,256], index: 5, kind: input, shape index: {}]
  %s6 = inlined_call_operand.vmem [shape: f32[32,16], index: 6, kind: output, shape index: {}]
  %s7 = sld [smem:[#allocation0]]
  $region50: #{tpu_custom_call.1} parent=0
    _
  %s9 = ssub.s32 1, %s7
  %s10 = scalar_select 0, %s9, %s7
  $region1: #{tpu_custom_call.1} parent=0
    #allocation2 [shape = 'u8[8192]{0}', space=vmem, size = 0x2000, scoped, tag = 'input window, operand 0, single buffered']
    #allocation3 [shape = 's32[1]{0}', space=sflag, size = 0x4, scoped, tag = 'scoped memory for tpu_custom_call.1']
    #allocation4 [shape = 'u8[65536]{0}', space=vmem, size = 0x10000, scoped, tag = 'input window, operand 1, single buffered']
    #allocation5 [shape = 's32[1]{0}', space=sflag, size = 0x4, scoped, tag = 'scoped memory for tpu_custom_call.1']
    #allocation6 [shape = 'u8[131072]{0}', space=vmem, size = 0x20000, scoped, tag = 'input window, operand 2, single buffered']
    #allocation7 [shape = 'u8[131072]{0}', space=vmem, size = 0x20000, scoped, tag = 'input window, operand 4, single buffered']
    #allocation8 [shape = 's32[1]{0}', space=sflag, size = 0x4, scoped, tag = 'scoped memory for tpu_custom_call.1']
    %11 = vsyncpa [#allocation3], 0
    %12 = vsyncpa [#allocation5], 0
    %13 = vsyncpa [#allocation8], 0
    // Predicated region
    $region2: #{tpu_custom_call.1} parent=1 // pred_check
      _
    $region3: #{tpu_custom_call.1} parent=1 // pred_check_branch
      %15 = sbr.rel (0) target = $region5
    $region4: #{tpu_custom_call.1} parent=1 // pred_region
      %17 = vsyncadd [#allocation3], 0
      %s18 = sshll.u32 %s0, 4
      %s19 = int_to_ptr.hbm [resolvable:$true] %s18
      %s20 = sshll.u32 [#allocation2], 4
      %s21 = int_to_ptr.vmem [resolvable:$true] %s20
      %26 = dma.hbm_to_vmem [thread:$0]  %s19, 256, %s21, [#allocation3], 64, 64, 4
    $region5: #{tpu_custom_call.1} parent=1 // pred_fallthru
      _
    // Predicated region
    $region6: #{tpu_custom_call.1} parent=1 // pred_check
      _
    $region7: #{tpu_custom_call.1} parent=1 // pred_check_branch
      %28 = sbr.rel (0) target = $region9
    $region8: #{tpu_custom_call.1} parent=1 // pred_region
      %30 = vsyncadd [#allocation5], 0
      %s31 = sshll.u32 %s1, 4
      %s32 = int_to_ptr.hbm [resolvable:$true] %s31
      %s33 = sshll.u32 [#allocation4], 4
      %s34 = int_to_ptr.vmem [resolvable:$true] %s33
      %39 = dma.hbm_to_vmem [thread:$0]  %s32, 2048, %s34, [#allocation5], 128, 128, 8
    $region9: #{tpu_custom_call.1} parent=1 // pred_fallthru
      _
    // Predicated region
    $region10: #{tpu_custom_call.1} parent=1 // pred_check
      _
    $region11: #{tpu_custom_call.1} parent=1 // pred_check_branch
      %41 = sbr.rel (0) target = $region13
    $region12: #{tpu_custom_call.1} parent=1 // pred_region
      %43 = vsyncadd [#allocation5], 0
      %s44 = sshll.u32 %s2, 4
      %s45 = int_to_ptr.hbm [resolvable:$true] %s44
      %s46 = sshll.u32 [#allocation6], 4
      %s47 = int_to_ptr.vmem [resolvable:$true] %s46
      %52 = dma.hbm_to_vmem [thread:$0]  %s45, 4096, %s47, [#allocation5], 128, 128, 8
    $region13: #{tpu_custom_call.1} parent=1 // pred_fallthru
      _
    // Predicated region
    $region14: #{tpu_custom_call.1} parent=1 // pred_check
      _
    $region15: #{tpu_custom_call.1} parent=1 // pred_check_branch
      %54 = sbr.rel (0) target = $region17
    $region16: #{tpu_custom_call.1} parent=1 // pred_region
      _
    $region17: #{tpu_custom_call.1} parent=1 // pred_fallthru
      _
    // Predicated region
    $region18: #{tpu_custom_call.1} parent=1 // pred_check
      _
    $region19: #{tpu_custom_call.1} parent=1 // pred_check_branch
      %56 = sbr.rel (0) target = $region21
    $region20: #{tpu_custom_call.1} parent=1 // pred_region
      %58 = vsyncadd [#allocation8], 0
      %s59 = sshll.u32 %s4, 4
      %s60 = int_to_ptr.hbm [resolvable:$true] %s59
      %s61 = sshll.u32 [#allocation7], 4
      %s62 = int_to_ptr.vmem [resolvable:$true] %s61
      %67 = dma.hbm_to_vmem [thread:$0]  %s60, 4096, %s62, [#allocation8], 128, 128, 8
    $region21: #{tpu_custom_call.1} parent=1 // pred_fallthru
      _
    // Predicated region
    $region22: #{tpu_custom_call.1} parent=1 // pred_check
      _
    $region23: #{tpu_custom_call.1} parent=1 // pred_check_branch
      %69 = sbr.rel (0) target = $region25
    $region24: #{tpu_custom_call.1} parent=1 // pred_region
      _
    $region25: #{tpu_custom_call.1} parent=1 // pred_fallthru
      _
    // Predicated region
    $region26: #{tpu_custom_call.1} parent=1 // pred_check
      _
    $region27: #{tpu_custom_call.1} parent=1 // pred_check_branch
      %71 = sbr.rel (0) target = $region29
    $region28: #{tpu_custom_call.1} parent=1 // pred_region
      %73 = dma.done [#allocation3], 256
    $region29: #{tpu_custom_call.1} parent=1 // pred_fallthru
      _
    // Predicated region
    $region30: #{tpu_custom_call.1} parent=1 // pred_check
      _
    $region31: #{tpu_custom_call.1} parent=1 // pred_check_branch
      %75 = sbr.rel (0) target = $region33
    $region32: #{tpu_custom_call.1} parent=1 // pred_region
      %77 = dma.done [#allocation5], 2048
    $region33: #{tpu_custom_call.1} parent=1 // pred_fallthru
      _
    // Predicated region
    $region34: #{tpu_custom_call.1} parent=1 // pred_check
      _
    $region35: #{tpu_custom_call.1} parent=1 // pred_check_branch
      %79 = sbr.rel (0) target = $region37
    $region36: #{tpu_custom_call.1} parent=1 // pred_region
      %81 = dma.done [#allocation5], 4096
    $region37: #{tpu_custom_call.1} parent=1 // pred_fallthru
      _
    // Predicated region
    $region38: #{tpu_custom_call.1} parent=1 // pred_check
      _
    $region39: #{tpu_custom_call.1} parent=1 // pred_check_branch
      %83 = sbr.rel (0) target = $region41
    $region40: #{tpu_custom_call.1} parent=1 // pred_region
      %85 = dma.done [#allocation8], 4096
    $region41: #{tpu_custom_call.1} parent=1 // pred_fallthru
      _
    %v86 = vld [vmem:[#allocation2] sm:$0xf]
    %v87 = vld [vmem:[#allocation2 + $0x4] sm:$0xf]
    %v88 = vld [vmem:[#allocation2 + $0x8] sm:$0xf]
    %v89 = vld [vmem:[#allocation2 + $0xc] sm:$0xf]
    %v90 = vld [vmem:[#allocation4] sm:$0xff]
    %v91 = vld [vmem:[#allocation4 + $0x8] sm:$0xff]
    %v92 = vld [vmem:[#allocation4 + $0x10] sm:$0xff]
    %v93 = vld [vmem:[#allocation4 + $0x18] sm:$0xff]
    %v94 = vld [vmem:[#allocation4 + $0x20] sm:$0xff]
    %v95 = vld [vmem:[#allocation4 + $0x28] sm:$0xff]
    %v96 = vld [vmem:[#allocation4 + $0x30] sm:$0xff]
    %v97 = vld [vmem:[#allocation4 + $0x38] sm:$0xff]
    %v98 = vld [vmem:[#allocation4 + $0x40] sm:$0xff]
    %v99 = vld [vmem:[#allocation4 + $0x48] sm:$0xff]
    %v100 = vld [vmem:[#allocation4 + $0x50] sm:$0xff]
    %v101 = vld [vmem:[#allocation4 + $0x58] sm:$0xff]
    %v102 = vld [vmem:[#allocation4 + $0x60] sm:$0xff]
    %v103 = vld [vmem:[#allocation4 + $0x68] sm:$0xff]
    %v104 = vld [vmem:[#allocation4 + $0x70] sm:$0xff]
    %v105 = vld [vmem:[#allocation4 + $0x78] sm:$0xff]
    %v110 = vunpack.c.l.b16 %v86
    %v111 = vunpack.c.l.b16 %v87
    %v112 = vunpack.c.l.b16 %v88
    %v113 = vunpack.c.l.b16 %v89
    %v114 = vpack.c.b16 %v111, %v110
    %v115 = vpack.c.b16 %v113, %v112
    %v134 = vunpack.c.l.b16 %v90
    %v135 = vunpack.c.h.b16 %v90
    %v136 = vunpack.c.l.b16 %v91
    %v137 = vunpack.c.h.b16 %v91
    %v138 = vunpack.c.l.b16 %v92
    %v139 = vunpack.c.h.b16 %v92
    %v140 = vunpack.c.l.b16 %v93
    %v141 = vunpack.c.h.b16 %v93
    %v142 = vunpack.c.l.b16 %v94
    %v143 = vunpack.c.h.b16 %v94
    %v144 = vunpack.c.l.b16 %v95
    %v145 = vunpack.c.h.b16 %v95
    %v146 = vunpack.c.l.b16 %v96
    %v147 = vunpack.c.h.b16 %v96
    %v148 = vunpack.c.l.b16 %v97
    %v149 = vunpack.c.h.b16 %v97
    %v150 = vunpack.c.l.b16 %v98
    %v151 = vunpack.c.h.b16 %v98
    %v152 = vunpack.c.l.b16 %v99
    %v153 = vunpack.c.h.b16 %v99
    %v154 = vunpack.c.l.b16 %v100
    %v155 = vunpack.c.h.b16 %v100
    %v156 = vunpack.c.l.b16 %v101
    %v157 = vunpack.c.h.b16 %v101
    %v158 = vunpack.c.l.b16 %v102
    %v159 = vunpack.c.h.b16 %v102
    %v160 = vunpack.c.l.b16 %v103
    %v161 = vunpack.c.h.b16 %v103
    %v162 = vunpack.c.l.b16 %v104
    %v163 = vunpack.c.h.b16 %v104
    %v164 = vunpack.c.l.b16 %v105
    %v165 = vunpack.c.h.b16 %v105
    %v166 = vpack.c.b16 %v136, %v134
    %v167 = vpack.c.b16 %v137, %v135
    %v168 = vpack.c.b16 %v140, %v138
    %v169 = vpack.c.b16 %v141, %v139
    %v170 = vpack.c.b16 %v144, %v142
    %v171 = vpack.c.b16 %v145, %v143
    %v172 = vpack.c.b16 %v148, %v146
    %v173 = vpack.c.b16 %v149, %v147
    %v174 = vpack.c.b16 %v152, %v150
    %v175 = vpack.c.b16 %v153, %v151
    %v176 = vpack.c.b16 %v156, %v154
    %v177 = vpack.c.b16 %v157, %v155
    %v178 = vpack.c.b16 %v160, %v158
    %v179 = vpack.c.b16 %v161, %v159
    %v180 = vpack.c.b16 %v164, %v162
    %v181 = vpack.c.b16 %v165, %v163
    %198 = vmatpush.bf16.msra.mxu0 %v180
    %199 = vmatpush.bf16.msra.mxu0 %v178
    %200 = vmatpush.bf16.msra.mxu0 %v176
    %201 = vmatpush.bf16.msra.mxu0 %v174
    %202 = vmatpush.bf16.msra.mxu0 %v172
    %203 = vmatpush.bf16.msra.mxu0 %v170
    %204 = vmatpush.bf16.msra.mxu0 %v168
    %205 = vmatpush.bf16.msra.mxu0 %v166
    %206 = vmatmul.bf16.gmra.mxu0 %v114
    %v207 = vpop.f32.mrf.mxu0
    %v208 = vadd.f32 0.0, %v207
    %v209 = vpop.f32.mrf.mxu0
    %v210 = vadd.f32 0.0, %v209
    %211 = vmatmul.bf16.gmra.mxu0 %v115
    %v212 = vpop.f32.mrf.mxu0
    %v213 = vadd.f32 0.0, %v212
    %v214 = vpop.f32.mrf.mxu0
    %v215 = vadd.f32 0.0, %v214
    %216 = vdwg.mxu0
    %217 = vmatpush.bf16.msra.mxu0 %v181
    %218 = vmatpush.bf16.msra.mxu0 %v179
    %219 = vmatpush.bf16.msra.mxu0 %v177
    %220 = vmatpush.bf16.msra.mxu0 %v175
    %221 = vmatpush.bf16.msra.mxu0 %v173
    %222 = vmatpush.bf16.msra.mxu0 %v171
    %223 = vmatpush.bf16.msra.mxu0 %v169
    %224 = vmatpush.bf16.msra.mxu0 %v167
    %225 = vmatmul.bf16.gmra.mxu0 %v114
    %v226 = vpop.f32.mrf.mxu0
    %v227 = vadd.f32 0.0, %v226
    %v228 = vpop.f32.mrf.mxu0
    %v229 = vadd.f32 0.0, %v228
    %230 = vmatmul.bf16.gmra.mxu0 %v115
    %v231 = vpop.f32.mrf.mxu0
    %v232 = vadd.f32 0.0, %v231
    %v233 = vpop.f32.mrf.mxu0
    %v234 = vadd.f32 0.0, %v233
    %235 = vdwg.mxu0
    %v236 = vpack.c.bf16 %v227, %v208
    %v237 = vpack.c.bf16 %v229, %v210
    %v238 = vpack.c.bf16 %v232, %v213
    %v239 = vpack.c.bf16 %v234, %v215
    %v240 = vunpack.c.l.bf16 %v236
    %v241 = vunpack.c.h.bf16 %v236
    %v242 = vunpack.c.l.bf16 %v237
    %v243 = vunpack.c.h.bf16 %v237
    %v244 = vunpack.c.l.bf16 %v238
    %v245 = vunpack.c.h.bf16 %v238
    %v246 = vunpack.c.l.bf16 %v239
    %v247 = vunpack.c.h.bf16 %v239
    %v248 = vmax.f32 %v240, 0.0
    %v249 = vmax.f32 %v241, 0.0
    %v250 = vmax.f32 %v242, 0.0
    %v251 = vmax.f32 %v243, 0.0
    %v252 = vmax.f32 %v244, 0.0
    %v253 = vmax.f32 %v245, 0.0
    %v254 = vmax.f32 %v246, 0.0
    %v255 = vmax.f32 %v247, 0.0
    %v256 = vpack.c.bf16 %v249, %v248
    %v257 = vpack.c.bf16 %v251, %v250
    %v258 = vpack.c.bf16 %v253, %v252
    %v259 = vpack.c.bf16 %v255, %v254
    %v260 = vld [vmem:[#allocation6] sm:$0xff]
    %v261 = vld [vmem:[#allocation6 + $0x8] sm:$0xff]
    %v262 = vld [vmem:[#allocation6 + $0x10] sm:$0xff]
    %v263 = vld [vmem:[#allocation6 + $0x18] sm:$0xff]
    %v264 = vld [vmem:[#allocation6 + $0x20] sm:$0xff]
    %v265 = vld [vmem:[#allocation6 + $0x28] sm:$0xff]
    %v266 = vld [vmem:[#allocation6 + $0x30] sm:$0xff]
    %v267 = vld [vmem:[#allocation6 + $0x38] sm:$0xff]
    %v268 = vld [vmem:[#allocation6 + $0x40] sm:$0xff]
    %v269 = vld [vmem:[#allocation6 + $0x48] sm:$0xff]
    %v270 = vld [vmem:[#allocation6 + $0x50] sm:$0xff]
    %v271 = vld [vmem:[#allocation6 + $0x58] sm:$0xff]
    %v272 = vld [vmem:[#allocation6 + $0x60] sm:$0xff]
    %v273 = vld [vmem:[#allocation6 + $0x68] sm:$0xff]
    %v274 = vld [vmem:[#allocation6 + $0x70] sm:$0xff]
    %v275 = vld [vmem:[#allocation6 + $0x78] sm:$0xff]
    %v276 = vld [vmem:[#allocation6 + $0x80] sm:$0xff]
    %v277 = vld [vmem:[#allocation6 + $0x88] sm:$0xff]
    %v278 = vld [vmem:[#allocation6 + $0x90] sm:$0xff]
    %v279 = vld [vmem:[#allocation6 + $0x98] sm:$0xff]
    %v280 = vld [vmem:[#allocation6 + $0xa0] sm:$0xff]
    %v281 = vld [vmem:[#allocation6 + $0xa8] sm:$0xff]
    %v282 = vld [vmem:[#allocation6 + $0xb0] sm:$0xff]
    %v283 = vld [vmem:[#allocation6 + $0xb8] sm:$0xff]
    %v284 = vld [vmem:[#allocation6 + $0xc0] sm:$0xff]
    %v285 = vld [vmem:[#allocation6 + $0xc8] sm:$0xff]
    %v286 = vld [vmem:[#allocation6 + $0xd0] sm:$0xff]
    %v287 = vld [vmem:[#allocation6 + $0xd8] sm:$0xff]
    %v288 = vld [vmem:[#allocation6 + $0xe0] sm:$0xff]
    %v289 = vld [vmem:[#allocation6 + $0xe8] sm:$0xff]
    %v290 = vld [vmem:[#allocation6 + $0xf0] sm:$0xff]
    %v291 = vld [vmem:[#allocation6 + $0xf8] sm:$0xff]
    %v296 = vunpack.c.l.b16 %v256
    %v297 = vunpack.c.h.b16 %v256
    %v298 = vunpack.c.l.b16 %v257
    %v299 = vunpack.c.h.b16 %v257
    %v300 = vunpack.c.l.b16 %v258
    %v301 = vunpack.c.h.b16 %v258
    %v302 = vunpack.c.l.b16 %v259
    %v303 = vunpack.c.h.b16 %v259
    %v304 = vpack.c.b16 %v298, %v296
    %v305 = vpack.c.b16 %v299, %v297
    %v306 = vpack.c.b16 %v302, %v300
    %v307 = vpack.c.b16 %v303, %v301
    %v344 = vunpack.c.l.b16 %v260
    %v345 = vunpack.c.h.b16 %v260
    %v346 = vunpack.c.l.b16 %v261
    %v347 = vunpack.c.h.b16 %v261
    %v348 = vunpack.c.l.b16 %v262
    %v349 = vunpack.c.h.b16 %v262
    %v350 = vunpack.c.l.b16 %v263
    %v351 = vunpack.c.h.b16 %v263
    %v352 = vunpack.c.l.b16 %v264
    %v353 = vunpack.c.h.b16 %v264
    %v354 = vunpack.c.l.b16 %v265
    %v355 = vunpack.c.h.b16 %v265
    %v356 = vunpack.c.l.b16 %v266
    %v357 = vunpack.c.h.b16 %v266
    %v358 = vunpack.c.l.b16 %v267
    %v359 = vunpack.c.h.b16 %v267
    %v360 = vunpack.c.l.b16 %v268
    %v361 = vunpack.c.h.b16 %v268
    %v362 = vunpack.c.l.b16 %v269
    %v363 = vunpack.c.h.b16 %v269
    %v364 = vunpack.c.l.b16 %v270
    %v365 = vunpack.c.h.b16 %v270
    %v366 = vunpack.c.l.b16 %v271
    %v367 = vunpack.c.h.b16 %v271
    %v368 = vunpack.c.l.b16 %v272
    %v369 = vunpack.c.h.b16 %v272
    %v370 = vunpack.c.l.b16 %v273
    %v371 = vunpack.c.h.b16 %v273
    %v372 = vunpack.c.l.b16 %v274
    %v373 = vunpack.c.h.b16 %v274
    %v374 = vunpack.c.l.b16 %v275
    %v375 = vunpack.c.h.b16 %v275
    %v376 = vunpack.c.l.b16 %v276
    %v377 = vunpack.c.h.b16 %v276
    %v378 = vunpack.c.l.b16 %v277
    %v379 = vunpack.c.h.b16 %v277
    %v380 = vunpack.c.l.b16 %v278
    %v381 = vunpack.c.h.b16 %v278
    %v382 = vunpack.c.l.b16 %v279
    %v383 = vunpack.c.h.b16 %v279
    %v384 = vunpack.c.l.b16 %v280
    %v385 = vunpack.c.h.b16 %v280
    %v386 = vunpack.c.l.b16 %v281
    %v387 = vunpack.c.h.b16 %v281
    %v388 = vunpack.c.l.b16 %v282
    %v389 = vunpack.c.h.b16 %v282
    %v390 = vunpack.c.l.b16 %v283
    %v391 = vunpack.c.h.b16 %v283
    %v392 = vunpack.c.l.b16 %v284
    %v393 = vunpack.c.h.b16 %v284
    %v394 = vunpack.c.l.b16 %v285
    %v395 = vunpack.c.h.b16 %v285
    %v396 = vunpack.c.l.b16 %v286
    %v397 = vunpack.c.h.b16 %v286
    %v398 = vunpack.c.l.b16 %v287
    %v399 = vunpack.c.h.b16 %v287
    %v400 = vunpack.c.l.b16 %v288
    %v401 = vunpack.c.h.b16 %v288
    %v402 = vunpack.c.l.b16 %v289
    %v403 = vunpack.c.h.b16 %v289
    %v404 = vunpack.c.l.b16 %v290
    %v405 = vunpack.c.h.b16 %v290
    %v406 = vunpack.c.l.b16 %v291
    %v407 = vunpack.c.h.b16 %v291
    %v408 = vpack.c.b16 %v346, %v344
    %v409 = vpack.c.b16 %v347, %v345
    %v410 = vpack.c.b16 %v350, %v348
    %v411 = vpack.c.b16 %v351, %v349
    %v412 = vpack.c.b16 %v354, %v352
    %v413 = vpack.c.b16 %v355, %v353
    %v414 = vpack.c.b16 %v358, %v356
    %v415 = vpack.c.b16 %v359, %v357
    %v416 = vpack.c.b16 %v362, %v360
    %v417 = vpack.c.b16 %v363, %v361
    %v418 = vpack.c.b16 %v366, %v364
    %v419 = vpack.c.b16 %v367, %v365
    %v420 = vpack.c.b16 %v370, %v368
    %v421 = vpack.c.b16 %v371, %v369
    %v422 = vpack.c.b16 %v374, %v372
    %v423 = vpack.c.b16 %v375, %v373
    %v424 = vpack.c.b16 %v378, %v376
    %v425 = vpack.c.b16 %v379, %v377
    %v426 = vpack.c.b16 %v382, %v380
    %v427 = vpack.c.b16 %v383, %v381
    %v428 = vpack.c.b16 %v386, %v384
    %v429 = vpack.c.b16 %v387, %v385
    %v430 = vpack.c.b16 %v390, %v388
    %v431 = vpack.c.b16 %v391, %v389
    %v432 = vpack.c.b16 %v394, %v392
    %v433 = vpack.c.b16 %v395, %v393
    %v434 = vpack.c.b16 %v398, %v396
    %v435 = vpack.c.b16 %v399, %v397
    %v436 = vpack.c.b16 %v402, %v400
    %v437 = vpack.c.b16 %v403, %v401
    %v438 = vpack.c.b16 %v406, %v404
    %v439 = vpack.c.b16 %v407, %v405
    %472 = vmatpush.bf16.msra.mxu0 %v422
    %473 = vmatpush.bf16.msra.mxu0 %v420
    %474 = vmatpush.bf16.msra.mxu0 %v418
    %475 = vmatpush.bf16.msra.mxu0 %v416
    %476 = vmatpush.bf16.msra.mxu0 %v414
    %477 = vmatpush.bf16.msra.mxu0 %v412
    %478 = vmatpush.bf16.msra.mxu0 %v410
    %479 = vmatpush.bf16.msra.mxu0 %v408
    %480 = vmatmul.bf16.gmra.mxu0 %v304
    %v481 = vpop.f32.mrf.mxu0
    %v482 = vadd.f32 0.0, %v481
    %v483 = vpop.f32.mrf.mxu0
    %v484 = vadd.f32 0.0, %v483
    %485 = vmatmul.bf16.gmra.mxu0 %v306
    %v486 = vpop.f32.mrf.mxu0
    %v487 = vadd.f32 0.0, %v486
    %v488 = vpop.f32.mrf.mxu0
    %v489 = vadd.f32 0.0, %v488
    %490 = vdwg.mxu0
    %491 = vmatpush.bf16.msra.mxu0 %v438
    %492 = vmatpush.bf16.msra.mxu0 %v436
    %493 = vmatpush.bf16.msra.mxu0 %v434
    %494 = vmatpush.bf16.msra.mxu0 %v432
    %495 = vmatpush.bf16.msra.mxu0 %v430
    %496 = vmatpush.bf16.msra.mxu0 %v428
    %497 = vmatpush.bf16.msra.mxu0 %v426
    %498 = vmatpush.bf16.msra.mxu0 %v424
    %499 = vmatmul.bf16.gmra.mxu0 %v305
    %v500 = vpop.f32.mrf.mxu0
    %v501 = vadd.f32 %v482, %v500
    %v502 = vpop.f32.mrf.mxu0
    %v503 = vadd.f32 %v484, %v502
    %504 = vmatmul.bf16.gmra.mxu0 %v307
    %v505 = vpop.f32.mrf.mxu0
    %v506 = vadd.f32 %v487, %v505
    %v507 = vpop.f32.mrf.mxu0
    %v508 = vadd.f32 %v489, %v507
    %509 = vdwg.mxu0
    %510 = vmatpush.bf16.msra.mxu0 %v423
    %511 = vmatpush.bf16.msra.mxu0 %v421
    %512 = vmatpush.bf16.msra.mxu0 %v419
    %513 = vmatpush.bf16.msra.mxu0 %v417
    %514 = vmatpush.bf16.msra.mxu0 %v415
    %515 = vmatpush.bf16.msra.mxu0 %v413
    %516 = vmatpush.bf16.msra.mxu0 %v411
    %517 = vmatpush.bf16.msra.mxu0 %v409
    %518 = vmatmul.bf16.gmra.mxu0 %v304
    %v519 = vpop.f32.mrf.mxu0
    %v520 = vadd.f32 0.0, %v519
    %v521 = vpop.f32.mrf.mxu0
    %v522 = vadd.f32 0.0, %v521
    %523 = vmatmul.bf16.gmra.mxu0 %v306
    %v524 = vpop.f32.mrf.mxu0
    %v525 = vadd.f32 0.0, %v524
    %v526 = vpop.f32.mrf.mxu0
    %v527 = vadd.f32 0.0, %v526
    %528 = vdwg.mxu0
    %529 = vmatpush.bf16.msra.mxu0 %v439
    %530 = vmatpush.bf16.msra.mxu0 %v437
    %531 = vmatpush.bf16.msra.mxu0 %v435
    %532 = vmatpush.bf16.msra.mxu0 %v433
    %533 = vmatpush.bf16.msra.mxu0 %v431
    %534 = vmatpush.bf16.msra.mxu0 %v429
    %535 = vmatpush.bf16.msra.mxu0 %v427
    %536 = vmatpush.bf16.msra.mxu0 %v425
    %537 = vmatmul.bf16.gmra.mxu0 %v305
    %v538 = vpop.f32.mrf.mxu0
    %v539 = vadd.f32 %v520, %v538
    %v540 = vpop.f32.mrf.mxu0
    %v541 = vadd.f32 %v522, %v540
    %542 = vmatmul.bf16.gmra.mxu0 %v307
    %v543 = vpop.f32.mrf.mxu0
    %v544 = vadd.f32 %v525, %v543
    %v545 = vpop.f32.mrf.mxu0
    %v546 = vadd.f32 %v527, %v545
    %547 = vdwg.mxu0
    %v548 = vpack.c.bf16 %v539, %v501
    %v549 = vpack.c.bf16 %v541, %v503
    %v550 = vpack.c.bf16 %v544, %v506
    %v551 = vpack.c.bf16 %v546, %v508
    %v552 = vld [vmem:[%s3] sm:$0x3]
    %554 = vst [vmem:[#allocation1] ss:$9 sm:$0xff] %v552
    %v555 = vld [vmem:[#allocation1] sm:$0xff]
    %v556 = vld [vmem:[#allocation1 + $0x9] sm:$0xff]
    %v557 = vpack.i.b16 %v555, %v555
    %v559 = vperm.slane %v557, 0
    %v560 = vpack.i.b16 %v556, %v556
    %v562 = vperm.slane %v560, 0
    %v563 = vunpack.c.l.bf16 %v548
    %v564 = vunpack.c.h.bf16 %v548
    %v565 = vunpack.c.l.bf16 %v549
    %v566 = vunpack.c.h.bf16 %v549
    %v567 = vunpack.c.l.bf16 %v550
    %v568 = vunpack.c.h.bf16 %v550
    %v569 = vunpack.c.l.bf16 %v551
    %v570 = vunpack.c.h.bf16 %v551
    %v571 = vunpack.c.l.bf16 %v559
    %v572 = vunpack.c.l.bf16 %v562
    %v573 = vadd.f32 %v563, %v571
    %v574 = vadd.f32 %v564, %v572
    %v575 = vadd.f32 %v565, %v571
    %v576 = vadd.f32 %v566, %v572
    %v577 = vadd.f32 %v567, %v571
    %v578 = vadd.f32 %v568, %v572
    %v579 = vadd.f32 %v569, %v571
    %v580 = vadd.f32 %v570, %v572
    %v581 = vpack.c.bf16 %v574, %v573
    %v582 = vpack.c.bf16 %v576, %v575
    %v583 = vpack.c.bf16 %v578, %v577
    %v584 = vpack.c.bf16 %v580, %v579
    %v585 = vunpack.c.l.bf16 %v581
    %v586 = vunpack.c.h.bf16 %v581
    %v587 = vunpack.c.l.bf16 %v582
    %v588 = vunpack.c.h.bf16 %v582
    %v589 = vunpack.c.l.bf16 %v583
    %v590 = vunpack.c.h.bf16 %v583
    %v591 = vunpack.c.l.bf16 %v584
    %v592 = vunpack.c.h.bf16 %v584
    %v593 = vmax.f32 %v585, 0.0
    %v594 = vmax.f32 %v586, 0.0
    %v595 = vmax.f32 %v587, 0.0
    %v596 = vmax.f32 %v588, 0.0
    %v597 = vmax.f32 %v589, 0.0
    %v598 = vmax.f32 %v590, 0.0
    %v599 = vmax.f32 %v591, 0.0
    %v600 = vmax.f32 %v592, 0.0
    %v601 = vpack.c.bf16 %v595, %v593
    %v602 = vpack.c.bf16 %v596, %v594
    %v603 = vpack.c.bf16 %v599, %v597
    %v604 = vpack.c.bf16 %v600, %v598
    %v605 = vld [vmem:[#allocation7] sm:$0xff]
    %v606 = vld [vmem:[#allocation7 + $0x8] sm:$0xff]
    %v607 = vld [vmem:[#allocation7 + $0x10] sm:$0xff]
    %v608 = vld [vmem:[#allocation7 + $0x18] sm:$0xff]
    %v609 = vld [vmem:[#allocation7 + $0x20] sm:$0xff]
    %v610 = vld [vmem:[#allocation7 + $0x28] sm:$0xff]
    %v611 = vld [vmem:[#allocation7 + $0x30] sm:$0xff]
    %v612 = vld [vmem:[#allocation7 + $0x38] sm:$0xff]
    %v613 = vld [vmem:[#allocation7 + $0x40] sm:$0xff]
    %v614 = vld [vmem:[#allocation7 + $0x48] sm:$0xff]
    %v615 = vld [vmem:[#allocation7 + $0x50] sm:$0xff]
    %v616 = vld [vmem:[#allocation7 + $0x58] sm:$0xff]
    %v617 = vld [vmem:[#allocation7 + $0x60] sm:$0xff]
    %v618 = vld [vmem:[#allocation7 + $0x68] sm:$0xff]
    %v619 = vld [vmem:[#allocation7 + $0x70] sm:$0xff]
    %v620 = vld [vmem:[#allocation7 + $0x78] sm:$0xff]
    %v621 = vld [vmem:[#allocation7 + $0x80] sm:$0xff]
    %v622 = vld [vmem:[#allocation7 + $0x88] sm:$0xff]
    %v623 = vld [vmem:[#allocation7 + $0x90] sm:$0xff]
    %v624 = vld [vmem:[#allocation7 + $0x98] sm:$0xff]
    %v625 = vld [vmem:[#allocation7 + $0xa0] sm:$0xff]
    %v626 = vld [vmem:[#allocation7 + $0xa8] sm:$0xff]
    %v627 = vld [vmem:[#allocation7 + $0xb0] sm:$0xff]
    %v628 = vld [vmem:[#allocation7 + $0xb8] sm:$0xff]
    %v629 = vld [vmem:[#allocation7 + $0xc0] sm:$0xff]
    %v630 = vld [vmem:[#allocation7 + $0xc8] sm:$0xff]
    %v631 = vld [vmem:[#allocation7 + $0xd0] sm:$0xff]
    %v632 = vld [vmem:[#allocation7 + $0xd8] sm:$0xff]
    %v633 = vld [vmem:[#allocation7 + $0xe0] sm:$0xff]
    %v634 = vld [vmem:[#allocation7 + $0xe8] sm:$0xff]
    %v635 = vld [vmem:[#allocation7 + $0xf0] sm:$0xff]
    %v636 = vld [vmem:[#allocation7 + $0xf8] sm:$0xff]
    %v669 = vunpack.c.l.b16 %v605
    %v670 = vunpack.c.h.b16 %v605
    %v671 = vunpack.c.l.b16 %v606
    %v672 = vunpack.c.h.b16 %v606
    %v673 = vunpack.c.l.b16 %v607
    %v674 = vunpack.c.h.b16 %v607
    %v675 = vunpack.c.l.b16 %v608
    %v676 = vunpack.c.h.b16 %v608
    %v677 = vunpack.c.l.b16 %v609
    %v678 = vunpack.c.h.b16 %v609
    %v679 = vunpack.c.l.b16 %v610
    %v680 = vunpack.c.h.b16 %v610
    %v681 = vunpack.c.l.b16 %v611
    %v682 = vunpack.c.h.b16 %v611
    %v683 = vunpack.c.l.b16 %v612
    %v684 = vunpack.c.h.b16 %v612
    %v685 = vunpack.c.l.b16 %v613
    %v686 = vunpack.c.h.b16 %v613
    %v687 = vunpack.c.l.b16 %v614
    %v688 = vunpack.c.h.b16 %v614
    %v689 = vunpack.c.l.b16 %v615
    %v690 = vunpack.c.h.b16 %v615
    %v691 = vunpack.c.l.b16 %v616
    %v692 = vunpack.c.h.b16 %v616
    %v693 = vunpack.c.l.b16 %v617
    %v694 = vunpack.c.h.b16 %v617
    %v695 = vunpack.c.l.b16 %v618
    %v696 = vunpack.c.h.b16 %v618
    %v697 = vunpack.c.l.b16 %v619
    %v698 = vunpack.c.h.b16 %v619
    %v699 = vunpack.c.l.b16 %v620
    %v700 = vunpack.c.h.b16 %v620
    %v701 = vunpack.c.l.b16 %v621
    %v702 = vunpack.c.h.b16 %v621
    %v703 = vunpack.c.l.b16 %v622
    %v704 = vunpack.c.h.b16 %v622
    %v705 = vunpack.c.l.b16 %v623
    %v706 = vunpack.c.h.b16 %v623
    %v707 = vunpack.c.l.b16 %v624
    %v708 = vunpack.c.h.b16 %v624
    %v709 = vunpack.c.l.b16 %v625
    %v710 = vunpack.c.h.b16 %v625
    %v711 = vunpack.c.l.b16 %v626
    %v712 = vunpack.c.h.b16 %v626
    %v713 = vunpack.c.l.b16 %v627
    %v714 = vunpack.c.h.b16 %v627
    %v715 = vunpack.c.l.b16 %v628
    %v716 = vunpack.c.h.b16 %v628
    %v717 = vunpack.c.l.b16 %v629
    %v718 = vunpack.c.h.b16 %v629
    %v719 = vunpack.c.l.b16 %v630
    %v720 = vunpack.c.h.b16 %v630
    %v721 = vunpack.c.l.b16 %v631
    %v722 = vunpack.c.h.b16 %v631
    %v723 = vunpack.c.l.b16 %v632
    %v724 = vunpack.c.h.b16 %v632
    %v725 = vunpack.c.l.b16 %v633
    %v726 = vunpack.c.h.b16 %v633
    %v727 = vunpack.c.l.b16 %v634
    %v728 = vunpack.c.h.b16 %v634
    %v729 = vunpack.c.l.b16 %v635
    %v730 = vunpack.c.h.b16 %v635
    %v731 = vunpack.c.l.b16 %v636
    %v732 = vunpack.c.h.b16 %v636
    %v733 = vpack.c.b16 %v671, %v669
    %v734 = vpack.c.b16 %v672, %v670
    %v735 = vpack.c.b16 %v675, %v673
    %v736 = vpack.c.b16 %v676, %v674
    %v737 = vpack.c.b16 %v679, %v677
    %v738 = vpack.c.b16 %v680, %v678
    %v739 = vpack.c.b16 %v683, %v681
    %v740 = vpack.c.b16 %v684, %v682
    %v741 = vpack.c.b16 %v687, %v685
    %v742 = vpack.c.b16 %v688, %v686
    %v743 = vpack.c.b16 %v691, %v689
    %v744 = vpack.c.b16 %v692, %v690
    %v745 = vpack.c.b16 %v695, %v693
    %v746 = vpack.c.b16 %v696, %v694
    %v747 = vpack.c.b16 %v699, %v697
    %v748 = vpack.c.b16 %v700, %v698
    %v749 = vpack.c.b16 %v703, %v701
    %v750 = vpack.c.b16 %v704, %v702
    %v751 = vpack.c.b16 %v707, %v705
    %v752 = vpack.c.b16 %v708, %v706
    %v753 = vpack.c.b16 %v711, %v709
    %v754 = vpack.c.b16 %v712, %v710
    %v755 = vpack.c.b16 %v715, %v713
    %v756 = vpack.c.b16 %v716, %v714
    %v757 = vpack.c.b16 %v719, %v717
    %v758 = vpack.c.b16 %v720, %v718
    %v759 = vpack.c.b16 %v723, %v721
    %v760 = vpack.c.b16 %v724, %v722
    %v761 = vpack.c.b16 %v727, %v725
    %v762 = vpack.c.b16 %v728, %v726
    %v763 = vpack.c.b16 %v731, %v729
    %v764 = vpack.c.b16 %v732, %v730
    %797 = vmatpush.bf16.msra.mxu0 %v747
    %798 = vmatpush.bf16.msra.mxu0 %v745
    %799 = vmatpush.bf16.msra.mxu0 %v743
    %800 = vmatpush.bf16.msra.mxu0 %v741
    %801 = vmatpush.bf16.msra.mxu0 %v739
    %802 = vmatpush.bf16.msra.mxu0 %v737
    %803 = vmatpush.bf16.msra.mxu0 %v735
    %804 = vmatpush.bf16.msra.mxu0 %v733
    %805 = vmatmul.bf16.gmra.mxu0 %v601
    %v806 = vpop.f32.mrf.mxu0
    %v807 = vadd.f32 0.0, %v806
    %v808 = vpop.f32.mrf.mxu0
    %v809 = vadd.f32 0.0, %v808
    %810 = vmatmul.bf16.gmra.mxu0 %v603
    %v811 = vpop.f32.mrf.mxu0
    %v812 = vadd.f32 0.0, %v811
    %v813 = vpop.f32.mrf.mxu0
    %v814 = vadd.f32 0.0, %v813
    %815 = vdwg.mxu0
    %816 = vmatpush.bf16.msra.mxu0 %v763
    %817 = vmatpush.bf16.msra.mxu0 %v761
    %818 = vmatpush.bf16.msra.mxu0 %v759
    %819 = vmatpush.bf16.msra.mxu0 %v757
    %820 = vmatpush.bf16.msra.mxu0 %v755
    %821 = vmatpush.bf16.msra.mxu0 %v753
    %822 = vmatpush.bf16.msra.mxu0 %v751
    %823 = vmatpush.bf16.msra.mxu0 %v749
    %824 = vmatmul.bf16.gmra.mxu0 %v602
    %v825 = vpop.f32.mrf.mxu0
    %v826 = vadd.f32 %v807, %v825
    %v827 = vpop.f32.mrf.mxu0
    %v828 = vadd.f32 %v809, %v827
    %829 = vmatmul.bf16.gmra.mxu0 %v604
    %v830 = vpop.f32.mrf.mxu0
    %v831 = vadd.f32 %v812, %v830
    %v832 = vpop.f32.mrf.mxu0
    %v833 = vadd.f32 %v814, %v832
    %834 = vdwg.mxu0
    %835 = vmatpush.bf16.msra.mxu0 %v748
    %836 = vmatpush.bf16.msra.mxu0 %v746
    %837 = vmatpush.bf16.msra.mxu0 %v744
    %838 = vmatpush.bf16.msra.mxu0 %v742
    %839 = vmatpush.bf16.msra.mxu0 %v740
    %840 = vmatpush.bf16.msra.mxu0 %v738
    %841 = vmatpush.bf16.msra.mxu0 %v736
    %842 = vmatpush.bf16.msra.mxu0 %v734
    %843 = vmatmul.bf16.gmra.mxu0 %v601
    %v844 = vpop.f32.mrf.mxu0
    %v845 = vadd.f32 0.0, %v844
    %v846 = vpop.f32.mrf.mxu0
    %v847 = vadd.f32 0.0, %v846
    %848 = vmatmul.bf16.gmra.mxu0 %v603
    %v849 = vpop.f32.mrf.mxu0
    %v850 = vadd.f32 0.0, %v849
    %v851 = vpop.f32.mrf.mxu0
    %v852 = vadd.f32 0.0, %v851
    %853 = vdwg.mxu0
    %854 = vmatpush.bf16.msra.mxu0 %v764
    %855 = vmatpush.bf16.msra.mxu0 %v762
    %856 = vmatpush.bf16.msra.mxu0 %v760
    %857 = vmatpush.bf16.msra.mxu0 %v758
    %858 = vmatpush.bf16.msra.mxu0 %v756
    %859 = vmatpush.bf16.msra.mxu0 %v754
    %860 = vmatpush.bf16.msra.mxu0 %v752
    %861 = vmatpush.bf16.msra.mxu0 %v750
    %862 = vmatmul.bf16.gmra.mxu0 %v602
    %v863 = vpop.f32.mrf.mxu0
    %v864 = vadd.f32 %v845, %v863
    %v865 = vpop.f32.mrf.mxu0
    %v866 = vadd.f32 %v847, %v865
    %867 = vmatmul.bf16.gmra.mxu0 %v604
    %v868 = vpop.f32.mrf.mxu0
    %v869 = vadd.f32 %v850, %v868
    %v870 = vpop.f32.mrf.mxu0
    %v871 = vadd.f32 %v852, %v870
    %872 = vdwg.mxu0
    %v873 = vpack.c.bf16 %v864, %v826
    %v874 = vpack.c.bf16 %v866, %v828
    %v875 = vpack.c.bf16 %v869, %v831
    %v876 = vpack.c.bf16 %v871, %v833
    %v877 = vld [vmem:[%s5] sm:$0x3]
    %879 = vst [vmem:[#allocation1] ss:$9 sm:$0xff] %v877
    %v880 = vld [vmem:[#allocation1] sm:$0xff]
    %v881 = vld [vmem:[#allocation1 + $0x9] sm:$0xff]
    %v882 = vpack.i.b16 %v880, %v880
    %v884 = vperm.slane %v882, 0
    %v885 = vpack.i.b16 %v881, %v881
    %v887 = vperm.slane %v885, 0
    %v888 = vunpack.c.l.bf16 %v873
    %v889 = vunpack.c.h.bf16 %v873
    %v890 = vunpack.c.l.bf16 %v874
    %v891 = vunpack.c.h.bf16 %v874
    %v892 = vunpack.c.l.bf16 %v875
    %v893 = vunpack.c.h.bf16 %v875
    %v894 = vunpack.c.l.bf16 %v876
    %v895 = vunpack.c.h.bf16 %v876
    %v896 = vunpack.c.l.bf16 %v884
    %v897 = vunpack.c.l.bf16 %v887
    %v898 = vadd.f32 %v888, %v896
    %v899 = vadd.f32 %v889, %v897
    %v900 = vadd.f32 %v890, %v896
    %v901 = vadd.f32 %v891, %v897
    %v902 = vadd.f32 %v892, %v896
    %v903 = vadd.f32 %v893, %v897
    %v904 = vadd.f32 %v894, %v896
    %v905 = vadd.f32 %v895, %v897
    %v906 = vpack.c.bf16 %v899, %v898
    %v907 = vpack.c.bf16 %v901, %v900
    %v908 = vpack.c.bf16 %v903, %v902
    %v909 = vpack.c.bf16 %v905, %v904
    %v910 = vunpack.c.l.bf16 %v906
    %v911 = vunpack.c.h.bf16 %v906
    %v912 = vunpack.c.l.bf16 %v907
    %v913 = vunpack.c.h.bf16 %v907
    %v914 = vunpack.c.l.bf16 %v908
    %v915 = vunpack.c.h.bf16 %v908
    %v916 = vunpack.c.l.bf16 %v909
    %v917 = vunpack.c.h.bf16 %v909
    %v918 = vunpack.c.l.bf16 %v256
    %v919 = vunpack.c.h.bf16 %v256
    %v920 = vunpack.c.l.bf16 %v257
    %v921 = vunpack.c.h.bf16 %v257
    %v922 = vunpack.c.l.bf16 %v258
    %v923 = vunpack.c.h.bf16 %v258
    %v924 = vunpack.c.l.bf16 %v259
    %v925 = vunpack.c.h.bf16 %v259
    %v926 = vadd.f32 %v910, %v918
    %v927 = vadd.f32 %v911, %v919
    %v928 = vadd.f32 %v912, %v920
    %v929 = vadd.f32 %v913, %v921
    %v930 = vadd.f32 %v914, %v922
    %v931 = vadd.f32 %v915, %v923
    %v932 = vadd.f32 %v916, %v924
    %v933 = vadd.f32 %v917, %v925
    %v934 = vpack.c.bf16 %v927, %v926
    %v935 = vpack.c.bf16 %v929, %v928
    %v936 = vpack.c.bf16 %v931, %v930
    %v937 = vpack.c.bf16 %v933, %v932
    %v938 = vunpack.c.l.bf16 %v934
    %v939 = vunpack.c.h.bf16 %v934
    %v940 = vunpack.c.l.bf16 %v935
    %v941 = vunpack.c.h.bf16 %v935
    %v942 = vunpack.c.l.bf16 %v936
    %v943 = vunpack.c.h.bf16 %v936
    %v944 = vunpack.c.l.bf16 %v937
    %v945 = vunpack.c.h.bf16 %v937
    %v946 = vmax.f32 %v938, 0.0
    %v947 = vmax.f32 %v939, 0.0
    %v948 = vmax.f32 %v940, 0.0
    %v949 = vmax.f32 %v941, 0.0
    %v950 = vmax.f32 %v942, 0.0
    %v951 = vmax.f32 %v943, 0.0
    %v952 = vmax.f32 %v944, 0.0
    %v953 = vmax.f32 %v945, 0.0
    %v954 = vpack.c.bf16 %v947, %v946
    %v955 = vpack.c.bf16 %v949, %v948
    %v956 = vpack.c.bf16 %v951, %v950
    %v957 = vpack.c.bf16 %v953, %v952
    %v962 = vrot.slane %v954, 3
    %v963 = vrot.slane %v955, 3
    %v964 = vrot.slane %v956, 3
    %v965 = vrot.slane %v957, 3
    %vm966 = vcmask 1040384
    %v969 = vsel %vm966, %v954, %v962
    %vm970 = vcmask 1041409
    %v971 = vsel %vm970, %v954, %v962
    %v973 = vrot.slane %v971, 1
    %vm974 = vcmask 1042434
    %v975 = vsel %vm974, %v954, %v962
    %v977 = vrot.slane %v975, 2
    %vm978 = vcmask 1043459
    %v979 = vsel %vm978, %v954, %v962
    %v981 = vrot.slane %v979, 3
    %v984 = vsel %vm966, %v955, %v963
    %v985 = vsel %vm970, %v955, %v963
    %v987 = vrot.slane %v985, 1
    %v988 = vsel %vm974, %v955, %v963
    %v990 = vrot.slane %v988, 2
    %v991 = vsel %vm978, %v955, %v963
    %v993 = vrot.slane %v991, 3
    %v996 = vsel %vm966, %v956, %v964
    %v997 = vsel %vm970, %v956, %v964
    %v999 = vrot.slane %v997, 1
    %v1000 = vsel %vm974, %v956, %v964
    %v1002 = vrot.slane %v1000, 2
    %v1003 = vsel %vm978, %v956, %v964
    %v1005 = vrot.slane %v1003, 3
    %v1008 = vsel %vm966, %v957, %v965
    %v1009 = vsel %vm970, %v957, %v965
    %v1011 = vrot.slane %v1009, 1
    %v1012 = vsel %vm974, %v957, %v965
    %v1014 = vrot.slane %v1012, 2
    %v1015 = vsel %vm978, %v957, %v965
    %v1017 = vrot.slane %v1015, 3
    %v1034 = vunpack.c.l.bf16 %v969
    %v1035 = vunpack.c.l.bf16 %v973
    %v1036 = vunpack.c.l.bf16 %v977
    %v1037 = vunpack.c.l.bf16 %v981
    %v1038 = vunpack.c.l.bf16 %v984
    %v1039 = vunpack.c.l.bf16 %v987
    %v1040 = vunpack.c.l.bf16 %v990
    %v1041 = vunpack.c.l.bf16 %v993
    %v1042 = vunpack.c.l.bf16 %v996
    %v1043 = vunpack.c.l.bf16 %v999
    %v1044 = vunpack.c.l.bf16 %v1002
    %v1045 = vunpack.c.l.bf16 %v1005
    %v1046 = vunpack.c.l.bf16 %v1008
    %v1047 = vunpack.c.l.bf16 %v1011
    %v1048 = vunpack.c.l.bf16 %v1014
    %v1049 = vunpack.c.l.bf16 %v1017
    %1066 = vst [vmem:[#allocation1] ss:$4 sm:$0xff] %v1034
    %v1067 = vld.sshfl [vmem:[#allocation1] sm:$0xff pattern:$0x73625140]
    %v1068 = vld.sshfl [vmem:[#allocation1 + $0x8] sm:$0xff pattern:$0x73625140]
    %s1069 = scalar_lea.vmem [#allocation1], 32
    %1070 = vst [vmem:[%s1069] ss:$4 sm:$0xff] %v1035
    %v1071 = vld.sshfl [vmem:[#allocation1 + $0x20] sm:$0xff pattern:$0x73625140]
    %v1072 = vld.sshfl [vmem:[#allocation1 + $0x28] sm:$0xff pattern:$0x73625140]
    %1073 = vst [vmem:[#allocation1] ss:$4 sm:$0xff] %v1036
    %v1074 = vld.sshfl [vmem:[#allocation1] sm:$0xff pattern:$0x73625140]
    %v1075 = vld.sshfl [vmem:[#allocation1 + $0x8] sm:$0xff pattern:$0x73625140]
    %1076 = vst [vmem:[%s1069] ss:$4 sm:$0xff] %v1037
    %v1077 = vld.sshfl [vmem:[#allocation1 + $0x20] sm:$0xff pattern:$0x73625140]
    %v1078 = vld.sshfl [vmem:[#allocation1 + $0x28] sm:$0xff pattern:$0x73625140]
    %1079 = vst [vmem:[#allocation1] ss:$4 sm:$0xff] %v1038
    %v1080 = vld.sshfl [vmem:[#allocation1] sm:$0xff pattern:$0x73625140]
    %v1081 = vld.sshfl [vmem:[#allocation1 + $0x8] sm:$0xff pattern:$0x73625140]
    %1082 = vst [vmem:[%s1069] ss:$4 sm:$0xff] %v1039
    %v1083 = vld.sshfl [vmem:[#allocation1 + $0x20] sm:$0xff pattern:$0x73625140]
    %v1084 = vld.sshfl [vmem:[#allocation1 + $0x28] sm:$0xff pattern:$0x73625140]
    %1085 = vst [vmem:[#allocation1] ss:$4 sm:$0xff] %v1040
    %v1086 = vld.sshfl [vmem:[#allocation1] sm:$0xff pattern:$0x73625140]
    %v1087 = vld.sshfl [vmem:[#allocation1 + $0x8] sm:$0xff pattern:$0x73625140]
    %1088 = vst [vmem:[%s1069] ss:$4 sm:$0xff] %v1041
    %v1089 = vld.sshfl [vmem:[#allocation1 + $0x20] sm:$0xff pattern:$0x73625140]
    %v1090 = vld.sshfl [vmem:[#allocation1 + $0x28] sm:$0xff pattern:$0x73625140]
    %1091 = vst [vmem:[#allocation1] ss:$4 sm:$0xff] %v1042
    %v1092 = vld.sshfl [vmem:[#allocation1] sm:$0xff pattern:$0x73625140]
    %v1093 = vld.sshfl [vmem:[#allocation1 + $0x8] sm:$0xff pattern:$0x73625140]
    %1094 = vst [vmem:[%s1069] ss:$4 sm:$0xff] %v1043
    %v1095 = vld.sshfl [vmem:[#allocation1 + $0x20] sm:$0xff pattern:$0x73625140]
    %v1096 = vld.sshfl [vmem:[#allocation1 + $0x28] sm:$0xff pattern:$0x73625140]
    %1097 = vst [vmem:[#allocation1] ss:$4 sm:$0xff] %v1044
    %v1098 = vld.sshfl [vmem:[#allocation1] sm:$0xff pattern:$0x73625140]
    %v1099 = vld.sshfl [vmem:[#allocation1 + $0x8] sm:$0xff pattern:$0x73625140]
    %1100 = vst [vmem:[%s1069] ss:$4 sm:$0xff] %v1045
    %v1101 = vld.sshfl [vmem:[#allocation1 + $0x20] sm:$0xff pattern:$0x73625140]
    %v1102 = vld.sshfl [vmem:[#allocation1 + $0x28] sm:$0xff pattern:$0x73625140]
    %1103 = vst [vmem:[#allocation1] ss:$4 sm:$0xff] %v1046
    %v1104 = vld.sshfl [vmem:[#allocation1] sm:$0xff pattern:$0x73625140]
    %v1105 = vld.sshfl [vmem:[#allocation1 + $0x8] sm:$0xff pattern:$0x73625140]
    %1106 = vst [vmem:[%s1069] ss:$4 sm:$0xff] %v1047
    %v1107 = vld.sshfl [vmem:[#allocation1 + $0x20] sm:$0xff pattern:$0x73625140]
    %v1108 = vld.sshfl [vmem:[#allocation1 + $0x28] sm:$0xff pattern:$0x73625140]
    %1109 = vst [vmem:[#allocation1] ss:$4 sm:$0xff] %v1048
    %v1110 = vld.sshfl [vmem:[#allocation1] sm:$0xff pattern:$0x73625140]
    %v1111 = vld.sshfl [vmem:[#allocation1 + $0x8] sm:$0xff pattern:$0x73625140]
    %1112 = vst [vmem:[%s1069] ss:$4 sm:$0xff] %v1049
    %v1113 = vld.sshfl [vmem:[#allocation1 + $0x20] sm:$0xff pattern:$0x73625140]
    %v1114 = vld.sshfl [vmem:[#allocation1 + $0x28] sm:$0xff pattern:$0x73625140]
    %vm1147 = vcmask 1041408
    %v1148 = vsel %vm1147, %v1067, -inf
    %v1149 = vrot.slane %v1148, 4
    %v1150 = vmax.f32 %v1148, %v1149
    %v1151 = vrot.slane %v1150, 2
    %v1152 = vmax.f32 %v1150, %v1151
    %v1153 = vrot.slane %v1152, 1
    %v1154 = vmax.f32 %v1152, %v1153
    %v1155 = vsel %vm1147, %v1068, -inf
    %v1156 = vrot.slane %v1155, 4
    %v1157 = vmax.f32 %v1155, %v1156
    %v1158 = vrot.slane %v1157, 2
    %v1159 = vmax.f32 %v1157, %v1158
    %v1160 = vrot.slane %v1159, 1
    %v1161 = vmax.f32 %v1159, %v1160
    %v1162 = vsel %vm1147, %v1071, -inf
    %v1163 = vrot.slane %v1162, 4
    %v1164 = vmax.f32 %v1162, %v1163
    %v1165 = vrot.slane %v1164, 2
    %v1166 = vmax.f32 %v1164, %v1165
    %v1167 = vrot.slane %v1166, 1
    %v1168 = vmax.f32 %v1166, %v1167
    %v1169 = vsel %vm1147, %v1072, -inf
    %v1170 = vrot.slane %v1169, 4
    %v1171 = vmax.f32 %v1169, %v1170
    %v1172 = vrot.slane %v1171, 2
    %v1173 = vmax.f32 %v1171, %v1172
    %v1174 = vrot.slane %v1173, 1
    %v1175 = vmax.f32 %v1173, %v1174
    %v1176 = vsel %vm1147, %v1074, -inf
    %v1177 = vrot.slane %v1176, 4
    %v1178 = vmax.f32 %v1176, %v1177
    %v1179 = vrot.slane %v1178, 2
    %v1180 = vmax.f32 %v1178, %v1179
    %v1181 = vrot.slane %v1180, 1
    %v1182 = vmax.f32 %v1180, %v1181
    %v1183 = vsel %vm1147, %v1075, -inf
    %v1184 = vrot.slane %v1183, 4
    %v1185 = vmax.f32 %v1183, %v1184
    %v1186 = vrot.slane %v1185, 2
    %v1187 = vmax.f32 %v1185, %v1186
    %v1188 = vrot.slane %v1187, 1
    %v1189 = vmax.f32 %v1187, %v1188
    %v1190 = vsel %vm1147, %v1077, -inf
    %v1191 = vrot.slane %v1190, 4
    %v1192 = vmax.f32 %v1190, %v1191
    %v1193 = vrot.slane %v1192, 2
    %v1194 = vmax.f32 %v1192, %v1193
    %v1195 = vrot.slane %v1194, 1
    %v1196 = vmax.f32 %v1194, %v1195
    %v1197 = vsel %vm1147, %v1078, -inf
    %v1198 = vrot.slane %v1197, 4
    %v1199 = vmax.f32 %v1197, %v1198
    %v1200 = vrot.slane %v1199, 2
    %v1201 = vmax.f32 %v1199, %v1200
    %v1202 = vrot.slane %v1201, 1
    %v1203 = vmax.f32 %v1201, %v1202
    %v1204 = vsel %vm1147, %v1080, -inf
    %v1205 = vrot.slane %v1204, 4
    %v1206 = vmax.f32 %v1204, %v1205
    %v1207 = vrot.slane %v1206, 2
    %v1208 = vmax.f32 %v1206, %v1207
    %v1209 = vrot.slane %v1208, 1
    %v1210 = vmax.f32 %v1208, %v1209
    %v1211 = vsel %vm1147, %v1081, -inf
    %v1212 = vrot.slane %v1211, 4
    %v1213 = vmax.f32 %v1211, %v1212
    %v1214 = vrot.slane %v1213, 2
    %v1215 = vmax.f32 %v1213, %v1214
    %v1216 = vrot.slane %v1215, 1
    %v1217 = vmax.f32 %v1215, %v1216
    %v1218 = vsel %vm1147, %v1083, -inf
    %v1219 = vrot.slane %v1218, 4
    %v1220 = vmax.f32 %v1218, %v1219
    %v1221 = vrot.slane %v1220, 2
    %v1222 = vmax.f32 %v1220, %v1221
    %v1223 = vrot.slane %v1222, 1
    %v1224 = vmax.f32 %v1222, %v1223
    %v1225 = vsel %vm1147, %v1084, -inf
    %v1226 = vrot.slane %v1225, 4
    %v1227 = vmax.f32 %v1225, %v1226
    %v1228 = vrot.slane %v1227, 2
    %v1229 = vmax.f32 %v1227, %v1228
    %v1230 = vrot.slane %v1229, 1
    %v1231 = vmax.f32 %v1229, %v1230
    %v1232 = vsel %vm1147, %v1086, -inf
    %v1233 = vrot.slane %v1232, 4
    %v1234 = vmax.f32 %v1232, %v1233
    %v1235 = vrot.slane %v1234, 2
    %v1236 = vmax.f32 %v1234, %v1235
    %v1237 = vrot.slane %v1236, 1
    %v1238 = vmax.f32 %v1236, %v1237
    %v1239 = vsel %vm1147, %v1087, -inf
    %v1240 = vrot.slane %v1239, 4
    %v1241 = vmax.f32 %v1239, %v1240
    %v1242 = vrot.slane %v1241, 2
    %v1243 = vmax.f32 %v1241, %v1242
    %v1244 = vrot.slane %v1243, 1
    %v1245 = vmax.f32 %v1243, %v1244
    %v1246 = vsel %vm1147, %v1089, -inf
    %v1247 = vrot.slane %v1246, 4
    %v1248 = vmax.f32 %v1246, %v1247
    %v1249 = vrot.slane %v1248, 2
    %v1250 = vmax.f32 %v1248, %v1249
    %v1251 = vrot.slane %v1250, 1
    %v1252 = vmax.f32 %v1250, %v1251
    %v1253 = vsel %vm1147, %v1090, -inf
    %v1254 = vrot.slane %v1253, 4
    %v1255 = vmax.f32 %v1253, %v1254
    %v1256 = vrot.slane %v1255, 2
    %v1257 = vmax.f32 %v1255, %v1256
    %v1258 = vrot.slane %v1257, 1
    %v1259 = vmax.f32 %v1257, %v1258
    %v1260 = vsel %vm1147, %v1092, -inf
    %v1261 = vrot.slane %v1260, 4
    %v1262 = vmax.f32 %v1260, %v1261
    %v1263 = vrot.slane %v1262, 2
    %v1264 = vmax.f32 %v1262, %v1263
    %v1265 = vrot.slane %v1264, 1
    %v1266 = vmax.f32 %v1264, %v1265
    %v1267 = vsel %vm1147, %v1093, -inf
    %v1268 = vrot.slane %v1267, 4
    %v1269 = vmax.f32 %v1267, %v1268
    %v1270 = vrot.slane %v1269, 2
    %v1271 = vmax.f32 %v1269, %v1270
    %v1272 = vrot.slane %v1271, 1
    %v1273 = vmax.f32 %v1271, %v1272
    %v1274 = vsel %vm1147, %v1095, -inf
    %v1275 = vrot.slane %v1274, 4
    %v1276 = vmax.f32 %v1274, %v1275
    %v1277 = vrot.slane %v1276, 2
    %v1278 = vmax.f32 %v1276, %v1277
    %v1279 = vrot.slane %v1278, 1
    %v1280 = vmax.f32 %v1278, %v1279
    %v1281 = vsel %vm1147, %v1096, -inf
    %v1282 = vrot.slane %v1281, 4
    %v1283 = vmax.f32 %v1281, %v1282
    %v1284 = vrot.slane %v1283, 2
    %v1285 = vmax.f32 %v1283, %v1284
    %v1286 = vrot.slane %v1285, 1
    %v1287 = vmax.f32 %v1285, %v1286
    %v1288 = vsel %vm1147, %v1098, -inf
    %v1289 = vrot.slane %v1288, 4
    %v1290 = vmax.f32 %v1288, %v1289
    %v1291 = vrot.slane %v1290, 2
    %v1292 = vmax.f32 %v1290, %v1291
    %v1293 = vrot.slane %v1292, 1
    %v1294 = vmax.f32 %v1292, %v1293
    %v1295 = vsel %vm1147, %v1099, -inf
    %v1296 = vrot.slane %v1295, 4
    %v1297 = vmax.f32 %v1295, %v1296
    %v1298 = vrot.slane %v1297, 2
    %v1299 = vmax.f32 %v1297, %v1298
    %v1300 = vrot.slane %v1299, 1
    %v1301 = vmax.f32 %v1299, %v1300
    %v1302 = vsel %vm1147, %v1101, -inf
    %v1303 = vrot.slane %v1302, 4
    %v1304 = vmax.f32 %v1302, %v1303
    %v1305 = vrot.slane %v1304, 2
    %v1306 = vmax.f32 %v1304, %v1305
    %v1307 = vrot.slane %v1306, 1
    %v1308 = vmax.f32 %v1306, %v1307
    %v1309 = vsel %vm1147, %v1102, -inf
    %v1310 = vrot.slane %v1309, 4
    %v1311 = vmax.f32 %v1309, %v1310
    %v1312 = vrot.slane %v1311, 2
    %v1313 = vmax.f32 %v1311, %v1312
    %v1314 = vrot.slane %v1313, 1
    %v1315 = vmax.f32 %v1313, %v1314
    %v1316 = vsel %vm1147, %v1104, -inf
    %v1317 = vrot.slane %v1316, 4
    %v1318 = vmax.f32 %v1316, %v1317
    %v1319 = vrot.slane %v1318, 2
    %v1320 = vmax.f32 %v1318, %v1319
    %v1321 = vrot.slane %v1320, 1
    %v1322 = vmax.f32 %v1320, %v1321
    %v1323 = vsel %vm1147, %v1105, -inf
    %v1324 = vrot.slane %v1323, 4
    %v1325 = vmax.f32 %v1323, %v1324
    %v1326 = vrot.slane %v1325, 2
    %v1327 = vmax.f32 %v1325, %v1326
    %v1328 = vrot.slane %v1327, 1
    %v1329 = vmax.f32 %v1327, %v1328
    %v1330 = vsel %vm1147, %v1107, -inf
    %v1331 = vrot.slane %v1330, 4
    %v1332 = vmax.f32 %v1330, %v1331
    %v1333 = vrot.slane %v1332, 2
    %v1334 = vmax.f32 %v1332, %v1333
    %v1335 = vrot.slane %v1334, 1
    %v1336 = vmax.f32 %v1334, %v1335
    %v1337 = vsel %vm1147, %v1108, -inf
    %v1338 = vrot.slane %v1337, 4
    %v1339 = vmax.f32 %v1337, %v1338
    %v1340 = vrot.slane %v1339, 2
    %v1341 = vmax.f32 %v1339, %v1340
    %v1342 = vrot.slane %v1341, 1
    %v1343 = vmax.f32 %v1341, %v1342
    %v1344 = vsel %vm1147, %v1110, -inf
    %v1345 = vrot.slane %v1344, 4
    %v1346 = vmax.f32 %v1344, %v1345
    %v1347 = vrot.slane %v1346, 2
    %v1348 = vmax.f32 %v1346, %v1347
    %v1349 = vrot.slane %v1348, 1
    %v1350 = vmax.f32 %v1348, %v1349
    %v1351 = vsel %vm1147, %v1111, -inf
    %v1352 = vrot.slane %v1351, 4
    %v1353 = vmax.f32 %v1351, %v1352
    %v1354 = vrot.slane %v1353, 2
    %v1355 = vmax.f32 %v1353, %v1354
    %v1356 = vrot.slane %v1355, 1
    %v1357 = vmax.f32 %v1355, %v1356
    %v1358 = vsel %vm1147, %v1113, -inf
    %v1359 = vrot.slane %v1358, 4
    %v1360 = vmax.f32 %v1358, %v1359
    %v1361 = vrot.slane %v1360, 2
    %v1362 = vmax.f32 %v1360, %v1361
    %v1363 = vrot.slane %v1362, 1
    %v1364 = vmax.f32 %v1362, %v1363
    %v1365 = vsel %vm1147, %v1114, -inf
    %v1366 = vrot.slane %v1365, 4
    %v1367 = vmax.f32 %v1365, %v1366
    %v1368 = vrot.slane %v1367, 2
    %v1369 = vmax.f32 %v1367, %v1368
    %v1370 = vrot.slane %v1369, 1
    %v1371 = vmax.f32 %v1369, %v1370
    %v1372 = vpack.c.bf16 %v1161, %v1154
    %v1373 = vpack.c.bf16 %v1175, %v1168
    %v1374 = vpack.c.bf16 %v1189, %v1182
    %v1375 = vpack.c.bf16 %v1203, %v1196
    %v1376 = vpack.c.bf16 %v1217, %v1210
    %v1377 = vpack.c.bf16 %v1231, %v1224
    %v1378 = vpack.c.bf16 %v1245, %v1238
    %v1379 = vpack.c.bf16 %v1259, %v1252
    %v1380 = vpack.c.bf16 %v1273, %v1266
    %v1381 = vpack.c.bf16 %v1287, %v1280
    %v1382 = vpack.c.bf16 %v1301, %v1294
    %v1383 = vpack.c.bf16 %v1315, %v1308
    %v1384 = vpack.c.bf16 %v1329, %v1322
    %v1385 = vpack.c.bf16 %v1343, %v1336
    %v1386 = vpack.c.bf16 %v1357, %v1350
    %v1387 = vpack.c.bf16 %v1371, %v1364
    %v1388 = vunpack.c.l.bf16 %v1372
    %v1389 = vunpack.c.h.bf16 %v1372
    %v1390 = vunpack.c.l.bf16 %v1373
    %v1391 = vunpack.c.h.bf16 %v1373
    %v1392 = vunpack.c.l.bf16 %v1374
    %v1393 = vunpack.c.h.bf16 %v1374
    %v1394 = vunpack.c.l.bf16 %v1375
    %v1395 = vunpack.c.h.bf16 %v1375
    %v1396 = vunpack.c.l.bf16 %v1376
    %v1397 = vunpack.c.h.bf16 %v1376
    %v1398 = vunpack.c.l.bf16 %v1377
    %v1399 = vunpack.c.h.bf16 %v1377
    %v1400 = vunpack.c.l.bf16 %v1378
    %v1401 = vunpack.c.h.bf16 %v1378
    %v1402 = vunpack.c.l.bf16 %v1379
    %v1403 = vunpack.c.h.bf16 %v1379
    %v1404 = vunpack.c.l.bf16 %v1380
    %v1405 = vunpack.c.h.bf16 %v1380
    %v1406 = vunpack.c.l.bf16 %v1381
    %v1407 = vunpack.c.h.bf16 %v1381
    %v1408 = vunpack.c.l.bf16 %v1382
    %v1409 = vunpack.c.h.bf16 %v1382
    %v1410 = vunpack.c.l.bf16 %v1383
    %v1411 = vunpack.c.h.bf16 %v1383
    %v1412 = vunpack.c.l.bf16 %v1384
    %v1413 = vunpack.c.h.bf16 %v1384
    %v1414 = vunpack.c.l.bf16 %v1385
    %v1415 = vunpack.c.h.bf16 %v1385
    %v1416 = vunpack.c.l.bf16 %v1386
    %v1417 = vunpack.c.h.bf16 %v1386
    %v1418 = vunpack.c.l.bf16 %v1387
    %v1419 = vunpack.c.h.bf16 %v1387
    %v1452 = vsel %vm970, %v1390, %v1388
    %v1453 = vsel %vm974, %v1392, %v1452
    %v1454 = vsel %vm978, %v1394, %v1453
    %vm1455 = vcmask 1044484
    %v1456 = vsel %vm1455, %v1396, %v1454
    %vm1457 = vcmask 1045509
    %v1458 = vsel %vm1457, %v1398, %v1456
    %vm1459 = vcmask 1046534
    %v1460 = vsel %vm1459, %v1400, %v1458
    %vm1461 = vcmask 1047559
    %v1462 = vsel %vm1461, %v1402, %v1460
    %v1463 = vsel %vm970, %v1391, %v1389
    %v1464 = vsel %vm974, %v1393, %v1463
    %v1465 = vsel %vm978, %v1395, %v1464
    %v1466 = vsel %vm1455, %v1397, %v1465
    %v1467 = vsel %vm1457, %v1399, %v1466
    %v1468 = vsel %vm1459, %v1401, %v1467
    %v1469 = vsel %vm1461, %v1403, %v1468
    %v1470 = vsel %vm970, %v1406, %v1404
    %v1471 = vsel %vm974, %v1408, %v1470
    %v1472 = vsel %vm978, %v1410, %v1471
    %v1473 = vsel %vm1455, %v1412, %v1472
    %v1474 = vsel %vm1457, %v1414, %v1473
    %v1475 = vsel %vm1459, %v1416, %v1474
    %v1476 = vsel %vm1461, %v1418, %v1475
    %v1477 = vsel %vm970, %v1407, %v1405
    %v1478 = vsel %vm974, %v1409, %v1477
    %v1479 = vsel %vm978, %v1411, %v1478
    %v1480 = vsel %vm1455, %v1413, %v1479
    %v1481 = vsel %vm1457, %v1415, %v1480
    %v1482 = vsel %vm1459, %v1417, %v1481
    %v1483 = vsel %vm1461, %v1419, %v1482
    %v1484 = vrot.slane %v1469, 1
    %v1485 = vrot.slane %v1462, 1
    %v1486 = vrot.slane %v1469, 2
    %v1487 = vrot.slane %v1462, 2
    %v1488 = vrot.slane %v1469, 3
    %v1489 = vrot.slane %v1462, 3
    %v1490 = vrot.slane %v1469, 4
    %v1491 = vrot.slane %v1462, 4
    %v1492 = vrot.slane %v1469, 5
    %v1493 = vrot.slane %v1462, 5
    %v1494 = vrot.slane %v1469, 6
    %v1495 = vrot.slane %v1462, 6
    %v1496 = vrot.slane %v1469, 7
    %v1497 = vrot.slane %v1462, 7
    %v1498 = vrot.slane %v1483, 1
    %v1499 = vrot.slane %v1476, 1
    %v1500 = vrot.slane %v1483, 2
    %v1501 = vrot.slane %v1476, 2
    %v1502 = vrot.slane %v1483, 3
    %v1503 = vrot.slane %v1476, 3
    %v1504 = vrot.slane %v1483, 4
    %v1505 = vrot.slane %v1476, 4
    %v1506 = vrot.slane %v1483, 5
    %v1507 = vrot.slane %v1476, 5
    %v1508 = vrot.slane %v1483, 6
    %v1509 = vrot.slane %v1476, 6
    %v1510 = vrot.slane %v1483, 7
    %v1511 = vrot.slane %v1476, 7
    %v1544 = vmax.f32 %v1388, %v1469
    %v1545 = vmax.f32 %v1389, %v1462
    %v1546 = vmax.f32 %v1390, %v1484
    %v1547 = vmax.f32 %v1391, %v1485
    %v1548 = vmax.f32 %v1392, %v1486
    %v1549 = vmax.f32 %v1393, %v1487
    %v1550 = vmax.f32 %v1394, %v1488
    %v1551 = vmax.f32 %v1395, %v1489
    %v1552 = vmax.f32 %v1396, %v1490
    %v1553 = vmax.f32 %v1397, %v1491
    %v1554 = vmax.f32 %v1398, %v1492
    %v1555 = vmax.f32 %v1399, %v1493
    %v1556 = vmax.f32 %v1400, %v1494
    %v1557 = vmax.f32 %v1401, %v1495
    %v1558 = vmax.f32 %v1402, %v1496
    %v1559 = vmax.f32 %v1403, %v1497
    %v1560 = vmax.f32 %v1404, %v1483
    %v1561 = vmax.f32 %v1405, %v1476
    %v1562 = vmax.f32 %v1406, %v1498
    %v1563 = vmax.f32 %v1407, %v1499
    %v1564 = vmax.f32 %v1408, %v1500
    %v1565 = vmax.f32 %v1409, %v1501
    %v1566 = vmax.f32 %v1410, %v1502
    %v1567 = vmax.f32 %v1411, %v1503
    %v1568 = vmax.f32 %v1412, %v1504
    %v1569 = vmax.f32 %v1413, %v1505
    %v1570 = vmax.f32 %v1414, %v1506
    %v1571 = vmax.f32 %v1415, %v1507
    %v1572 = vmax.f32 %v1416, %v1508
    %v1573 = vmax.f32 %v1417, %v1509
    %v1574 = vmax.f32 %v1418, %v1510
    %v1575 = vmax.f32 %v1419, %v1511
    %v1608 = vrot.slane %v1546, 7
    %v1609 = vsel %vm970, %v1608, %v1544
    %v1610 = vrot.slane %v1548, 6
    %v1611 = vsel %vm974, %v1610, %v1609
    %v1612 = vrot.slane %v1550, 5
    %v1613 = vsel %vm978, %v1612, %v1611
    %v1614 = vrot.slane %v1552, 4
    %v1615 = vsel %vm1455, %v1614, %v1613
    %v1616 = vrot.slane %v1554, 3
    %v1617 = vsel %vm1457, %v1616, %v1615
    %v1618 = vrot.slane %v1556, 2
    %v1619 = vsel %vm1459, %v1618, %v1617
    %v1620 = vrot.slane %v1558, 1
    %v1621 = vsel %vm1461, %v1620, %v1619
    %v1622 = vrot.slane %v1547, 7
    %v1623 = vsel %vm970, %v1622, %v1545
    %v1624 = vrot.slane %v1549, 6
    %v1625 = vsel %vm974, %v1624, %v1623
    %v1626 = vrot.slane %v1551, 5
    %v1627 = vsel %vm978, %v1626, %v1625
    %v1628 = vrot.slane %v1553, 4
    %v1629 = vsel %vm1455, %v1628, %v1627
    %v1630 = vrot.slane %v1555, 3
    %v1631 = vsel %vm1457, %v1630, %v1629
    %v1632 = vrot.slane %v1557, 2
    %v1633 = vsel %vm1459, %v1632, %v1631
    %v1634 = vrot.slane %v1559, 1
    %v1635 = vsel %vm1461, %v1634, %v1633
    %v1636 = vrot.slane %v1562, 7
    %v1637 = vsel %vm970, %v1636, %v1560
    %v1638 = vrot.slane %v1564, 6
    %v1639 = vsel %vm974, %v1638, %v1637
    %v1640 = vrot.slane %v1566, 5
    %v1641 = vsel %vm978, %v1640, %v1639
    %v1642 = vrot.slane %v1568, 4
    %v1643 = vsel %vm1455, %v1642, %v1641
    %v1644 = vrot.slane %v1570, 3
    %v1645 = vsel %vm1457, %v1644, %v1643
    %v1646 = vrot.slane %v1572, 2
    %v1647 = vsel %vm1459, %v1646, %v1645
    %v1648 = vrot.slane %v1574, 1
    %v1649 = vsel %vm1461, %v1648, %v1647
    %v1650 = vrot.slane %v1563, 7
    %v1651 = vsel %vm970, %v1650, %v1561
    %v1652 = vrot.slane %v1565, 6
    %v1653 = vsel %vm974, %v1652, %v1651
    %v1654 = vrot.slane %v1567, 5
    %v1655 = vsel %vm978, %v1654, %v1653
    %v1656 = vrot.slane %v1569, 4
    %v1657 = vsel %vm1455, %v1656, %v1655
    %v1658 = vrot.slane %v1571, 3
    %v1659 = vsel %vm1457, %v1658, %v1657
    %v1660 = vrot.slane %v1573, 2
    %v1661 = vsel %vm1459, %v1660, %v1659
    %v1662 = vrot.slane %v1575, 1
    %v1663 = vsel %vm1461, %v1662, %v1661
    %1668 = vrot.lane.b32.xlu0 %v1621, 64
    %v1669 = vpop.permute.xlu0 %1668
    %1670 = vrot.lane.b32.xlu0 %v1649, 64
    %v1671 = vpop.permute.xlu0 %1670
    %1672 = vrot.lane.b32.xlu0 %v1635, 64
    %v1673 = vpop.permute.xlu0 %1672
    %1674 = vrot.lane.b32.xlu0 %v1663, 64
    %v1675 = vpop.permute.xlu0 %1674
    %v1676 = vlaneseq
    %v1677 = vand.u32 %v1676, 127
    %vm1678 = vcmp.lt.s32.totalorder %v1677, 64
    %v1679 = vsel %vm1678, %v1669, %v1673
    %v1680 = vsel %vm1678, %v1671, %v1675
    %v1681 = vsel %vm1678, %v1673, %v1669
    %v1682 = vsel %vm1678, %v1675, %v1671
    %v1687 = vrot.slane %v1681, 1
    %v1688 = vrot.slane %v1679, 1
    %v1689 = vrot.slane %v1681, 2
    %v1690 = vrot.slane %v1679, 2
    %v1691 = vrot.slane %v1681, 3
    %v1692 = vrot.slane %v1679, 3
    %v1693 = vrot.slane %v1681, 4
    %v1694 = vrot.slane %v1679, 4
    %v1695 = vrot.slane %v1681, 5
    %v1696 = vrot.slane %v1679, 5
    %v1697 = vrot.slane %v1681, 6
    %v1698 = vrot.slane %v1679, 6
    %v1699 = vrot.slane %v1681, 7
    %v1700 = vrot.slane %v1679, 7
    %v1701 = vrot.slane %v1682, 1
    %v1702 = vrot.slane %v1680, 1
    %v1703 = vrot.slane %v1682, 2
    %v1704 = vrot.slane %v1680, 2
    %v1705 = vrot.slane %v1682, 3
    %v1706 = vrot.slane %v1680, 3
    %v1707 = vrot.slane %v1682, 4
    %v1708 = vrot.slane %v1680, 4
    %v1709 = vrot.slane %v1682, 5
    %v1710 = vrot.slane %v1680, 5
    %v1711 = vrot.slane %v1682, 6
    %v1712 = vrot.slane %v1680, 6
    %v1713 = vrot.slane %v1682, 7
    %v1714 = vrot.slane %v1680, 7
    %v1747 = vmax.f32 %v1544, %v1681
    %v1748 = vmax.f32 %v1545, %v1679
    %v1749 = vmax.f32 %v1546, %v1687
    %v1750 = vmax.f32 %v1547, %v1688
    %v1751 = vmax.f32 %v1548, %v1689
    %v1752 = vmax.f32 %v1549, %v1690
    %v1753 = vmax.f32 %v1550, %v1691
    %v1754 = vmax.f32 %v1551, %v1692
    %v1755 = vmax.f32 %v1552, %v1693
    %v1756 = vmax.f32 %v1553, %v1694
    %v1757 = vmax.f32 %v1554, %v1695
    %v1758 = vmax.f32 %v1555, %v1696
    %v1759 = vmax.f32 %v1556, %v1697
    %v1760 = vmax.f32 %v1557, %v1698
    %v1761 = vmax.f32 %v1558, %v1699
    %v1762 = vmax.f32 %v1559, %v1700
    %v1763 = vmax.f32 %v1560, %v1682
    %v1764 = vmax.f32 %v1561, %v1680
    %v1765 = vmax.f32 %v1562, %v1701
    %v1766 = vmax.f32 %v1563, %v1702
    %v1767 = vmax.f32 %v1564, %v1703
    %v1768 = vmax.f32 %v1565, %v1704
    %v1769 = vmax.f32 %v1566, %v1705
    %v1770 = vmax.f32 %v1567, %v1706
    %v1771 = vmax.f32 %v1568, %v1707
    %v1772 = vmax.f32 %v1569, %v1708
    %v1773 = vmax.f32 %v1570, %v1709
    %v1774 = vmax.f32 %v1571, %v1710
    %v1775 = vmax.f32 %v1572, %v1711
    %v1776 = vmax.f32 %v1573, %v1712
    %v1777 = vmax.f32 %v1574, %v1713
    %v1778 = vmax.f32 %v1575, %v1714
    %v1811 = vrot.slane %v1749, 7
    %v1812 = vsel %vm970, %v1811, %v1747
    %v1813 = vrot.slane %v1751, 6
    %v1814 = vsel %vm974, %v1813, %v1812
    %v1815 = vrot.slane %v1753, 5
    %v1816 = vsel %vm978, %v1815, %v1814
    %v1817 = vrot.slane %v1755, 4
    %v1818 = vsel %vm1455, %v1817, %v1816
    %v1819 = vrot.slane %v1757, 3
    %v1820 = vsel %vm1457, %v1819, %v1818
    %v1821 = vrot.slane %v1759, 2
    %v1822 = vsel %vm1459, %v1821, %v1820
    %v1823 = vrot.slane %v1761, 1
    %v1824 = vsel %vm1461, %v1823, %v1822
    %v1825 = vrot.slane %v1750, 7
    %v1826 = vsel %vm970, %v1825, %v1748
    %v1827 = vrot.slane %v1752, 6
    %v1828 = vsel %vm974, %v1827, %v1826
    %v1829 = vrot.slane %v1754, 5
    %v1830 = vsel %vm978, %v1829, %v1828
    %v1831 = vrot.slane %v1756, 4
    %v1832 = vsel %vm1455, %v1831, %v1830
    %v1833 = vrot.slane %v1758, 3
    %v1834 = vsel %vm1457, %v1833, %v1832
    %v1835 = vrot.slane %v1760, 2
    %v1836 = vsel %vm1459, %v1835, %v1834
    %v1837 = vrot.slane %v1762, 1
    %v1838 = vsel %vm1461, %v1837, %v1836
    %v1839 = vrot.slane %v1765, 7
    %v1840 = vsel %vm970, %v1839, %v1763
    %v1841 = vrot.slane %v1767, 6
    %v1842 = vsel %vm974, %v1841, %v1840
    %v1843 = vrot.slane %v1769, 5
    %v1844 = vsel %vm978, %v1843, %v1842
    %v1845 = vrot.slane %v1771, 4
    %v1846 = vsel %vm1455, %v1845, %v1844
    %v1847 = vrot.slane %v1773, 3
    %v1848 = vsel %vm1457, %v1847, %v1846
    %v1849 = vrot.slane %v1775, 2
    %v1850 = vsel %vm1459, %v1849, %v1848
    %v1851 = vrot.slane %v1777, 1
    %v1852 = vsel %vm1461, %v1851, %v1850
    %v1853 = vrot.slane %v1766, 7
    %v1854 = vsel %vm970, %v1853, %v1764
    %v1855 = vrot.slane %v1768, 6
    %v1856 = vsel %vm974, %v1855, %v1854
    %v1857 = vrot.slane %v1770, 5
    %v1858 = vsel %vm978, %v1857, %v1856
    %v1859 = vrot.slane %v1772, 4
    %v1860 = vsel %vm1455, %v1859, %v1858
    %v1861 = vrot.slane %v1774, 3
    %v1862 = vsel %vm1457, %v1861, %v1860
    %v1863 = vrot.slane %v1776, 2
    %v1864 = vsel %vm1459, %v1863, %v1862
    %v1865 = vrot.slane %v1778, 1
    %v1866 = vsel %vm1461, %v1865, %v1864
    %1871 = vrot.lane.b32.xlu0 %v1824, 32
    %v1872 = vpop.permute.xlu0 %1871
    %1873 = vrot.lane.b32.xlu0 %v1852, 32
    %v1874 = vpop.permute.xlu0 %1873
    %1875 = vrot.lane.b32.xlu0 %v1838, 32
    %v1876 = vpop.permute.xlu0 %1875
    %1877 = vrot.lane.b32.xlu0 %v1866, 32
    %v1878 = vpop.permute.xlu0 %1877
    %vm1879 = vcmp.lt.s32.totalorder %v1677, 32
    %v1880 = vsel %vm1879, %v1876, %v1872
    %v1881 = vsel %vm1879, %v1878, %v1874
    %v1884 = vrot.slane %v1880, 1
    %v1885 = vrot.slane %v1880, 2
    %v1886 = vrot.slane %v1880, 3
    %v1887 = vrot.slane %v1880, 4
    %v1888 = vrot.slane %v1880, 5
    %v1889 = vrot.slane %v1880, 6
    %v1890 = vrot.slane %v1880, 7
    %v1891 = vrot.slane %v1881, 1
    %v1892 = vrot.slane %v1881, 2
    %v1893 = vrot.slane %v1881, 3
    %v1894 = vrot.slane %v1881, 4
    %v1895 = vrot.slane %v1881, 5
    %v1896 = vrot.slane %v1881, 6
    %v1897 = vrot.slane %v1881, 7
    %v1914 = vmax.f32 %v1747, %v1880
    %v1915 = vmax.f32 %v1749, %v1884
    %v1916 = vmax.f32 %v1751, %v1885
    %v1917 = vmax.f32 %v1753, %v1886
    %v1918 = vmax.f32 %v1755, %v1887
    %v1919 = vmax.f32 %v1757, %v1888
    %v1920 = vmax.f32 %v1759, %v1889
    %v1921 = vmax.f32 %v1761, %v1890
    %v1922 = vmax.f32 %v1763, %v1881
    %v1923 = vmax.f32 %v1765, %v1891
    %v1924 = vmax.f32 %v1767, %v1892
    %v1925 = vmax.f32 %v1769, %v1893
    %v1926 = vmax.f32 %v1771, %v1894
    %v1927 = vmax.f32 %v1773, %v1895
    %v1928 = vmax.f32 %v1775, %v1896
    %v1929 = vmax.f32 %v1777, %v1897
    %v1946 = vrot.slane %v1915, 7
    %v1947 = vsel %vm970, %v1946, %v1914
    %v1948 = vrot.slane %v1916, 6
    %v1949 = vsel %vm974, %v1948, %v1947
    %v1950 = vrot.slane %v1917, 5
    %v1951 = vsel %vm978, %v1950, %v1949
    %v1952 = vrot.slane %v1918, 4
    %v1953 = vsel %vm1455, %v1952, %v1951
    %v1954 = vrot.slane %v1919, 3
    %v1955 = vsel %vm1457, %v1954, %v1953
    %v1956 = vrot.slane %v1920, 2
    %v1957 = vsel %vm1459, %v1956, %v1955
    %v1958 = vrot.slane %v1921, 1
    %v1959 = vsel %vm1461, %v1958, %v1957
    %v1960 = vrot.slane %v1923, 7
    %v1961 = vsel %vm970, %v1960, %v1922
    %v1962 = vrot.slane %v1924, 6
    %v1963 = vsel %vm974, %v1962, %v1961
    %v1964 = vrot.slane %v1925, 5
    %v1965 = vsel %vm978, %v1964, %v1963
    %v1966 = vrot.slane %v1926, 4
    %v1967 = vsel %vm1455, %v1966, %v1965
    %v1968 = vrot.slane %v1927, 3
    %v1969 = vsel %vm1457, %v1968, %v1967
    %v1970 = vrot.slane %v1928, 2
    %v1971 = vsel %vm1459, %v1970, %v1969
    %v1972 = vrot.slane %v1929, 1
    %v1973 = vsel %vm1461, %v1972, %v1971
    %1976 = vxpose.xlu0.b32.start [1/16] %v1959, 128
    %1977 = vxpose.xlu0.b32.cont [2/16] %v1973, 128
    %1978 = vxpose.xlu0.b32.cont [3/16] 0.0, 128
    %1979 = vxpose.xlu0.b32.cont [4/16] 0.0, 128
    %1980 = vxpose.xlu0.b32.cont [5/16] 0.0, 128
    %1981 = vxpose.xlu0.b32.cont [6/16] 0.0, 128
    %1982 = vxpose.xlu0.b32.cont [7/16] 0.0, 128
    %1983 = vxpose.xlu0.b32.cont [8/16] 0.0, 128
    %1984 = vxpose.xlu0.b32.cont [9/16] 0.0, 128
    %1985 = vxpose.xlu0.b32.cont [10/16] 0.0, 128
    %1986 = vxpose.xlu0.b32.cont [11/16] 0.0, 128
    %1987 = vxpose.xlu0.b32.cont [12/16] 0.0, 128
    %1988 = vxpose.xlu0.b32.cont [13/16] 0.0, 128
    %1989 = vxpose.xlu0.b32.cont [14/16] 0.0, 128
    %1990 = vxpose.xlu0.b32.cont [15/16] 0.0, 128
    %1991 = vxpose.xlu0.b32.end [16/16] 0.0, 128
    %v1992 = vpop.trf.xlu0
    %v1993 = vpop.trf.xlu0
    %v1994 = vpop.trf.xlu0
    %v1995 = vpop.trf.xlu0
    %v1996 = vpop.trf.xlu0
    %v1997 = vpop.trf.xlu0
    %v1998 = vpop.trf.xlu0
    %v1999 = vpop.trf.xlu0
    %v2000 = vpop.trf.xlu0
    %v2001 = vpop.trf.xlu0
    %v2002 = vpop.trf.xlu0
    %v2003 = vpop.trf.xlu0
    %v2004 = vpop.trf.xlu0
    %v2005 = vpop.trf.xlu0
    %v2006 = vpop.trf.xlu0
    %v2007 = vpop.trf.xlu0
    %vm2008 = vcmask 130048
    %2009 = vst.msk [vmem:[%s6] sm:$0xff] %vm2008, %v1992
    %2010 = vst.msk [vmem:[%s6 + $0x8] sm:$0xff] %vm2008, %v1993
    %2011 = vst.msk [vmem:[%s6 + $0x10] sm:$0xff] %vm2008, %v1994
    %2012 = vst.msk [vmem:[%s6 + $0x18] sm:$0xff] %vm2008, %v1995
    // Predicated region
    $region42: #{tpu_custom_call.1} parent=1 // pred_check
      _
    $region43: #{tpu_custom_call.1} parent=1 // pred_check_branch
      %2014 = sbr.rel (0) target = $region45
    $region44: #{tpu_custom_call.1} parent=1 // pred_region
      _
    $region45: #{tpu_custom_call.1} parent=1 // pred_fallthru
      _
    // Predicated region
    $region46: #{tpu_custom_call.1} parent=1 // pred_check
      _
    $region47: #{tpu_custom_call.1} parent=1 // pred_check_branch
      %2016 = sbr.rel (0) target = $region49
    $region48: #{tpu_custom_call.1} parent=1 // pred_region
      _
    $region49: #{tpu_custom_call.1} parent=1 // pred_fallthru
      _
    %2017 = vsyncpa [#allocation3], 1
    %2018 = vsyncpa [#allocation5], 1
    %2019 = vsyncpa [#allocation8], 1

</llo_original>
